<compile_context>
chip_gen: v7x
topology: tpu7x:2x2x1
jax: 0.10.0
libtpu: 0.0.40
codegen_flags: <defaults>
</compile_context>

<pallas_src>
import math

import jax
import jax.numpy as jnp
from jax.experimental import pallas as pl
from jax.experimental.pallas import tpu as pltpu


def _round_up(x, m):
    return ((x + m - 1) // m) * m


def _vmem_limit_bytes():
    """Pick a per-generation VMEM scoped limit (leave ~25% headroom)."""
    try:
        cap = int(pltpu.get_tpu_info().vmem_capacity_bytes)
    except Exception:
        cap = 64 * 1024 * 1024
    return min(int(cap * 3 // 4), 100 * 1024 * 1024)


def _make_conv_kernels(*, kh, kw, sh, sw, TR, OW, OH, RB, C_pad, n_pad):
    """Build the stats-pass and fused BN+PReLU-pass kernel bodies."""
    taps = [(i, j) for i in range(kh) for j in range(kw)]
    TRW = TR * OW
    halo = (kh - 1) // sh
    BUF_ROWS = TR + halo
    # One flattened buffer per (i % sh, j): every tap becomes a contiguous,
    # statically-offset row slice of its buffer (no per-tap relayout).
    buf_keys = sorted({(i % sh, j) for (i, j) in taps})

    def _conv_tile(x_ref, w_ref):
        rb = pl.program_id(1)
        row0 = rb * TR
        bufs = {}
        for (ri, j) in buf_keys:
            pidx = ri * sw + (j % sw)                 # polyphase plane
            slab = x_ref[pidx,
                         pl.ds(row0, BUF_ROWS),
                         pl.ds(j // sw, OW),
                         :]                           # (BUF_ROWS, OW, C_pad)
            bufs[(ri, j)] = slab.reshape(BUF_ROWS * OW, C_pad)
        acc = None
        for t, (i, j) in enumerate(taps):
            off = (i // sh) * OW                      # static row offset
            rows = bufs[(i % sh, j)][off:off + TRW, :]
            contrib = jnp.dot(rows, w_ref[t],
                              preferred_element_type=jnp.float32)
            acc = contrib if acc is None else acc + contrib
        return acc                                    # (TRW, n_pad) f32

    def stats_kernel(x_ref, w_ref, sum_ref, ssq_ref):
        y = _conv_tile(x_ref, w_ref)

        def write_stats(yv):
            # Keep the 8-row sublane axis: pure VALU partial reduction here,
            # final 8 -> 1 reduction in the wrapper.
            y3 = yv.reshape(TRW // 8, 8, n_pad)
            sum_ref[0, 0] = jnp.sum(y3, axis=0)
            ssq_ref[0, 0] = jnp.sum(y3 * y3, axis=0)

        if RB * TR == OH:
            write_stats(y)
        else:
            rb = pl.program_id(1)
            last = RB - 1

            @pl.when(rb != last)
            def _():
                write_stats(y)

            @pl.when(rb == last)                      # only last block padded
            def _():
                rows_left = (OH - last * TR) * OW     # static
                rid = jax.lax.broadcasted_iota(jnp.int32, (TRW, n_pad), 0)
                write_stats(jnp.where(rid < rows_left, y, 0.0))

    def fused_kernel(x_ref, w_ref, scale_ref, shift_ref, alpha_ref, o_ref):
        y = _conv_tile(x_ref, w_ref)
        # y*scale + shift == gamma*(y-mean)/sqrt(var+eps)+beta ; then PReLU.
        y = y * scale_ref[...] + shift_ref[...]
        o_ref[0, 0] = jnp.where(y > 0, y, y * alpha_ref[...]).astype(o_ref.dtype)

    return stats_kernel, fused_kernel


def conv_block_forward(x_nchw, weight, gamma, beta, alpha,
                       stride=(1, 1), padding=(0, 0), groups=1, eps=1e-5,
                       target_rows=1024):
    # TODO(synk): groups > 1 (grouped / depthwise conv) is not implemented.
    if groups != 1:
        raise NotImplementedError("Conv_block groups > 1 not implemented")

    out_c, in_c, kh, kw = weight.shape
    N, C, H, W = x_nchw.shape
    assert C == in_c, (C, in_c)
    sh, sw = stride
    ph, pw = padding

    OH = (H + 2 * ph - kh) // sh + 1
    OW = (W + 2 * pw - kw) // sw + 1

    # Row tiling of the flattened (oh, ow) GEMM rows: TR whole output rows per
    # grid step, targeting ~target_rows rows, with TR*OW a multiple of 8 so
    # reshapes stay layout-friendly and the 8-sublane stats path is always on.
    row_mult = 8 // math.gcd(OW, 8)
    TR = max(1, target_rows // max(OW, 1))
    TR = max(row_mult, (TR // row_mult) * row_mult)
    TR = min(TR, _round_up(OH, row_mult))
    RB = -(-OH // TR)
    TRW = TR * OW
    P = sh * sw
    KK = kh * kw

    C_pad = _round_up(in_c, 8)        # sublane-align the contraction dim
    n_pad = _round_up(out_c, 128)     # lane-dense output channels

    # --- wrapper-side layout prep (size-preserving; no kh*kw expansion) -----
    # Polyphase ("space-to-batch") view of the zero-padded NHWC input: one
    # plane per (i % sh, j % sw) so every kernel tap is a unit-stride window.
    halo = (kh - 1) // sh
    Hq = max(RB * TR + halo, -(-(H + 2 * ph) // sh))
    Wq = max(OW + (kw - 1) // sw, -(-(W + 2 * pw) // sw))
    # bf16 cast fused with the pad (MXU-native inputs; halves HBM/VMEM for x).
    x_nhwc = jnp.transpose(x_nchw.astype(jnp.bfloat16), (0, 2, 3, 1))
    xpe = jnp.pad(x_nhwc, ((0, 0),
                           (ph, sh * Hq - H - ph),
                           (pw, sw * Wq - W - pw),
                           (0, C_pad - in_c)))        # one fused pad op
    if P == 1:
        xpoly = xpe                                   # (N, Hq, Wq, C_pad)
    else:
        xpoly = xpe.reshape(N, Hq, sh, Wq, sw, C_pad)
        xpoly = jnp.transpose(xpoly, (0, 2, 4, 1, 3, 5))
        xpoly = xpoly.reshape(N * P, Hq, Wq, C_pad)

    # PyTorch weight (out_c, in_c, kh, kw) -> (kh*kw, C_pad, n_pad), tap-major.
    wt = jnp.transpose(weight, (2, 3, 1, 0)).astype(jnp.bfloat16)
    wt = jnp.pad(wt, ((0, 0), (0, 0), (0, C_pad - in_c), (0, n_pad - out_c)))
    wt = wt.reshape(KK, C_pad, n_pad)

    stats_kernel, fused_kernel = _make_conv_kernels(
        kh=kh, kw=kw, sh=sh, sw=sw, TR=TR, OW=OW, OH=OH, RB=RB,
        C_pad=C_pad, n_pad=n_pad)

    # x / w index maps are constant along the row-block axis -> no re-fetch
    # across r and no duplicate DMA if the r axis were split across cores.
    x_spec = pl.BlockSpec((P, Hq, Wq, C_pad), lambda b, r: (b, 0, 0, 0))
    w_spec = pl.BlockSpec((KK, C_pad, n_pad), lambda b, r: (0, 0, 0))
    vec_spec = pl.BlockSpec((1, n_pad), lambda b, r: (0, 0))

    conv_flops = 2 * N * RB * TRW * C_pad * n_pad * KK
    x_bytes = xpoly.size * 2          # bf16
    w_bytes = wt.size * 2
    cparams = pltpu.CompilerParams(
        dimension_semantics=("parallel", "arbitrary"),
        vmem_limit_bytes=_vmem_limit_bytes())

    # ---- pass 1: conv recompute -> per-tile partial sum / sum-of-squares ----
    sums, ssqs = pl.pallas_call(
        stats_kernel,
        out_shape=(jax.ShapeDtypeStruct((N, RB, 8, n_pad), jnp.float32),
                   jax.ShapeDtypeStruct((N, RB, 8, n_pad), jnp.float32)),
        grid_spec=pltpu.PrefetchScalarGridSpec(
            num_scalar_prefetch=0,
            grid=(N, RB),
            in_specs=[x_spec, w_spec],
            out_specs=[
                pl.BlockSpec((1, 1, 8, n_pad), lambda b, r: (b, r, 0, 0)),
                pl.BlockSpec((1, 1, 8, n_pad), lambda b, r: (b, r, 0, 0)),
            ]),
        compiler_params=cparams,
        cost_estimate=pl.CostEstimate(
            flops=conv_flops, transcendentals=0,
            bytes_accessed=x_bytes + w_bytes + 2 * N * RB * 8 * n_pad * 4),
    )(xpoly, wt)

    # BatchNorm2d training-mode statistics over (N, OH, OW); padded rows /
    # channels contribute exactly zero, so divide by the true element count.
    m = jnp.float32(N * OH * OW)
    total = jnp.sum(sums, axis=(0, 1, 2))
    total_sq = jnp.sum(ssqs, axis=(0, 1, 2))
    mean = total / m
    var = jnp.maximum(total_sq / m - mean * mean, 0.0)

    gamma_p = jnp.pad(gamma.astype(jnp.float32), (0, n_pad - out_c))
    beta_p = jnp.pad(beta.astype(jnp.float32), (0, n_pad - out_c))
    alpha_v = jnp.broadcast_to(
        jnp.asarray(alpha, jnp.float32).reshape(-1), (out_c,))
    alpha_p = jnp.pad(alpha_v, (0, n_pad - out_c))
    scale = gamma_p * jax.lax.rsqrt(var + eps)
    shift = beta_p - mean * scale

    # ---- pass 2: conv recompute fused with BN affine + PReLU ----------------
    out = pl.pallas_call(
        fused_kernel,
        out_shape=jax.ShapeDtypeStruct((N, RB, TRW, n_pad), jnp.float32),
        grid_spec=pltpu.PrefetchScalarGridSpec(
            num_scalar_prefetch=0,
            grid=(N, RB),
            in_specs=[x_spec, w_spec, vec_spec, vec_spec, vec_spec],
            out_specs=pl.BlockSpec((1, 1, TRW, n_pad),
                                   lambda b, r: (b, r, 0, 0))),
        compiler_params=cparams,
        cost_estimate=pl.CostEstimate(
            flops=conv_flops, transcendentals=0,
            bytes_accessed=x_bytes + w_bytes + N * RB * TRW * n_pad * 4),
    )(xpoly, wt, scale.reshape(1, n_pad), shift.reshape(1, n_pad),
      alpha_p.reshape(1, n_pad))

    out = out.reshape(N, RB * TRW, n_pad)[:, :OH * OW, :out_c]
    out = out.reshape(N, OH, OW, out_c)
    # TODO(synk): skip this transpose when the consumer accepts NHWC.
    return jnp.transpose(out, (0, 3, 1, 2))    # NCHW, matching PyTorch


def _reference(x, weight, gamma, beta, alpha, stride, padding, eps=1e-5):
    y = jax.lax.conv_general_dilated(
        x, weight, window_strides=stride,
        padding=[(padding[0], padding[0]), (padding[1], padding[1])],
        dimension_numbers=("NCHW", "OIHW", "NCHW"))
    mean = jnp.mean(y, axis=(0, 2, 3), keepdims=True)
    var = jnp.mean((y - mean) ** 2, axis=(0, 2, 3), keepdims=True)
    yn = (y - mean) * jax.lax.rsqrt(var + eps)
    yn = yn * gamma[None, :, None, None] + beta[None, :, None, None]
    a = alpha[None, :, None, None]
    return jnp.where(yn > 0, yn, yn * a)


if __name__ == "__main__":
    key = jax.random.PRNGKey(0)
    k1, k2, k3, k4 = jax.random.split(key, 4)

    batch, in_c, out_c, h, w = 2, 4, 8, 16, 16
    kernel, padding = (3, 3), (1, 1)

    x = jax.random.normal(k1, (batch, in_c, h, w), jnp.float32)
    weight = 0.1 * jax.random.normal(
        k2, (out_c, in_c, kernel[0], kernel[1]), jnp.float32)
    gamma = 1.0 + 0.1 * jax.random.normal(k3, (out_c,), jnp.float32)   # BN weight
    beta = 0.1 * jax.random.normal(k4, (out_c,), jnp.float32)          # BN bias
    alpha = jnp.full((out_c,), 0.25, jnp.float32)                      # PReLU init

    # The kernel uses bf16 MXU inputs with f32 accumulation; the tight check is
    # against a reference fed the same bf16-quantized x/weight (isolates kernel
    # math), plus a looser sanity check against the pure-f32 reference.
    xq = x.astype(jnp.bfloat16).astype(jnp.float32)
    wq = weight.astype(jnp.bfloat16).astype(jnp.float32)

    # stride 1 (unit-stride), stride 2 (polyphase), and a forced multi-row-block
    # config (target_rows=80 -> RB>1 with padded rows) to exercise masking.
    configs = (((1, 1), 1024), ((2, 2), 1024), ((1, 1), 80))
    for stride, tr_target in configs:
        out = conv_block_forward(x, weight, gamma, beta, alpha,
                                 stride=stride, padding=padding,
                                 target_rows=tr_target)
        out = jax.block_until_ready(out)
        ref_q = _reference(xq, wq, gamma, beta, alpha, stride, padding)
        ref_f = _reference(x, weight, gamma, beta, alpha, stride, padding)
        assert out.shape == ref_q.shape, (stride, out.shape, ref_q.shape)
        err_q = float(jnp.max(jnp.abs(out - ref_q)))
        err_f = float(jnp.max(jnp.abs(out - ref_f)))
        assert err_q < 2e-3, (stride, tr_target, err_q)
        assert err_f < 5e-2, (stride, tr_target, err_f)

    print("KERNEL_OK")
</pallas_src>

<mosaic_0001>
module attributes {stable_mosaic.version = 11 : i64} {
  func.func @stats_kernel(%arg0: i32, %arg1: i32, %arg2: memref<1x18x18x8xbf16, #tpu.memory_space<vmem>>, %arg3: memref<9x8x128xbf16, #tpu.memory_space<vmem>>, %arg4: memref<1x1x8x128xf32, #tpu.memory_space<vmem>>, %arg5: memref<1x1x8x128xf32, #tpu.memory_space<vmem>>) attributes {dimension_semantics = [#tpu.dimension_semantics<parallel>, #tpu.dimension_semantics<arbitrary>], iteration_bounds = array<i64: 2, 1>, scalar_prefetch = 0 : i64, scratch_operands = 0 : i64, tpu.core_type = #tpu.core_type<tc>, window_params = [{transform_indices = @transform_0, window_bounds = array<i64: 1, 18, 18, 8>}, {pipeline_mode = #tpu.pipeline_mode<synchronous>, transform_indices = @transform_1, window_bounds = array<i64: 9, 8, 128>}, {transform_indices = @transform_2, window_bounds = array<i64: 1, 1, 8, 128>}, {transform_indices = @transform_3, window_bounds = array<i64: 1, 1, 8, 128>}]} {
    %c16_i32 = arith.constant 16 : i32
    %0 = arith.muli %arg1, %c16_i32 : i32
    %c0 = arith.constant 0 : index
    %1 = arith.index_cast %0 : i32 to index
    %c0_0 = arith.constant 0 : index
    %c0_1 = arith.constant 0 : index
    %2 = vector.load %arg2[%c0, %1, %c0_0, %c0_1] : memref<1x18x18x8xbf16, #tpu.memory_space<vmem>>, vector<1x18x16x8xbf16>
    %3 = vector.shape_cast %2 : vector<1x18x16x8xbf16> to vector<18x16x8xbf16>
    %4 = vector.shape_cast %3 : vector<18x16x8xbf16> to vector<288x8xbf16>
    %c0_2 = arith.constant 0 : index
    %5 = arith.index_cast %0 : i32 to index
    %c1 = arith.constant 1 : index
    %c0_3 = arith.constant 0 : index
    %6 = vector.load %arg2[%c0_2, %5, %c1, %c0_3] : memref<1x18x18x8xbf16, #tpu.memory_space<vmem>>, vector<1x18x16x8xbf16>
    %7 = vector.shape_cast %6 : vector<1x18x16x8xbf16> to vector<18x16x8xbf16>
    %8 = vector.shape_cast %7 : vector<18x16x8xbf16> to vector<288x8xbf16>
    %c0_4 = arith.constant 0 : index
    %9 = arith.index_cast %0 : i32 to index
    %c2 = arith.constant 2 : index
    %c0_5 = arith.constant 0 : index
    %10 = vector.load %arg2[%c0_4, %9, %c2, %c0_5] : memref<1x18x18x8xbf16, #tpu.memory_space<vmem>>, vector<1x18x16x8xbf16>
    %11 = vector.shape_cast %10 : vector<1x18x16x8xbf16> to vector<18x16x8xbf16>
    %12 = vector.shape_cast %11 : vector<18x16x8xbf16> to vector<288x8xbf16>
    %13 = vector.extract_strided_slice %4 {offsets = [0, 0], sizes = [256, 8], strides = [1, 1]} : vector<288x8xbf16> to vector<256x8xbf16>
    %c0_6 = arith.constant 0 : index
    %c0_7 = arith.constant 0 : index
    %c0_8 = arith.constant 0 : index
    %14 = vector.load %arg3[%c0_6, %c0_7, %c0_8] : memref<9x8x128xbf16, #tpu.memory_space<vmem>>, vector<1x8x128xbf16>
    %15 = vector.shape_cast %14 : vector<1x8x128xbf16> to vector<8x128xbf16>
    %cst = arith.constant dense<0.000000e+00> : vector<256x128xf32>
    %16 = tpu.matmul %13, %15, %cst {dimension_numbers = #tpu.dot_dimension_numbers<[1], [0], [0], [1], [0, 0, 1, 1], [], []>} : vector<256x8xbf16>, vector<8x128xbf16>, vector<256x128xf32> -> vector<256x128xf32>
    %17 = vector.extract_strided_slice %8 {offsets = [0, 0], sizes = [256, 8], strides = [1, 1]} : vector<288x8xbf16> to vector<256x8xbf16>
    %c1_9 = arith.constant 1 : index
    %c0_10 = arith.constant 0 : index
    %c0_11 = arith.constant 0 : index
    %18 = vector.load %arg3[%c1_9, %c0_10, %c0_11] : memref<9x8x128xbf16, #tpu.memory_space<vmem>>, vector<1x8x128xbf16>
    %19 = vector.shape_cast %18 : vector<1x8x128xbf16> to vector<8x128xbf16>
    %cst_12 = arith.constant dense<0.000000e+00> : vector<256x128xf32>
    %20 = tpu.matmul %17, %19, %cst_12 {dimension_numbers = #tpu.dot_dimension_numbers<[1], [0], [0], [1], [0, 0, 1, 1], [], []>} : vector<256x8xbf16>, vector<8x128xbf16>, vector<256x128xf32> -> vector<256x128xf32>
    %21 = arith.addf %16, %20 : vector<256x128xf32>
    %22 = vector.extract_strided_slice %12 {offsets = [0, 0], sizes = [256, 8], strides = [1, 1]} : vector<288x8xbf16> to vector<256x8xbf16>
    %c2_13 = arith.constant 2 : index
    %c0_14 = arith.constant 0 : index
    %c0_15 = arith.constant 0 : index
    %23 = vector.load %arg3[%c2_13, %c0_14, %c0_15] : memref<9x8x128xbf16, #tpu.memory_space<vmem>>, vector<1x8x128xbf16>
    %24 = vector.shape_cast %23 : vector<1x8x128xbf16> to vector<8x128xbf16>
    %cst_16 = arith.constant dense<0.000000e+00> : vector<256x128xf32>
    %25 = tpu.matmul %22, %24, %cst_16 {dimension_numbers = #tpu.dot_dimension_numbers<[1], [0], [0], [1], [0, 0, 1, 1], [], []>} : vector<256x8xbf16>, vector<8x128xbf16>, vector<256x128xf32> -> vector<256x128xf32>
    %26 = arith.addf %21, %25 : vector<256x128xf32>
    %27 = vector.extract_strided_slice %4 {offsets = [16, 0], sizes = [256, 8], strides = [1, 1]} : vector<288x8xbf16> to vector<256x8xbf16>
    %c3 = arith.constant 3 : index
    %c0_17 = arith.constant 0 : index
    %c0_18 = arith.constant 0 : index
    %28 = vector.load %arg3[%c3, %c0_17, %c0_18] : memref<9x8x128xbf16, #tpu.memory_space<vmem>>, vector<1x8x128xbf16>
    %29 = vector.shape_cast %28 : vector<1x8x128xbf16> to vector<8x128xbf16>
    %cst_19 = arith.constant dense<0.000000e+00> : vector<256x128xf32>
    %30 = tpu.matmul %27, %29, %cst_19 {dimension_numbers = #tpu.dot_dimension_numbers<[1], [0], [0], [1], [0, 0, 1, 1], [], []>} : vector<256x8xbf16>, vector<8x128xbf16>, vector<256x128xf32> -> vector<256x128xf32>
    %31 = arith.addf %26, %30 : vector<256x128xf32>
    %32 = vector.extract_strided_slice %8 {offsets = [16, 0], sizes = [256, 8], strides = [1, 1]} : vector<288x8xbf16> to vector<256x8xbf16>
    %c4 = arith.constant 4 : index
    %c0_20 = arith.constant 0 : index
    %c0_21 = arith.constant 0 : index
    %33 = vector.load %arg3[%c4, %c0_20, %c0_21] : memref<9x8x128xbf16, #tpu.memory_space<vmem>>, vector<1x8x128xbf16>
    %34 = vector.shape_cast %33 : vector<1x8x128xbf16> to vector<8x128xbf16>
    %cst_22 = arith.constant dense<0.000000e+00> : vector<256x128xf32>
    %35 = tpu.matmul %32, %34, %cst_22 {dimension_numbers = #tpu.dot_dimension_numbers<[1], [0], [0], [1], [0, 0, 1, 1], [], []>} : vector<256x8xbf16>, vector<8x128xbf16>, vector<256x128xf32> -> vector<256x128xf32>
    %36 = arith.addf %31, %35 : vector<256x128xf32>
    %37 = vector.extract_strided_slice %12 {offsets = [16, 0], sizes = [256, 8], strides = [1, 1]} : vector<288x8xbf16> to vector<256x8xbf16>
    %c5 = arith.constant 5 : index
    %c0_23 = arith.constant 0 : index
    %c0_24 = arith.constant 0 : index
    %38 = vector.load %arg3[%c5, %c0_23, %c0_24] : memref<9x8x128xbf16, #tpu.memory_space<vmem>>, vector<1x8x128xbf16>
    %39 = vector.shape_cast %38 : vector<1x8x128xbf16> to vector<8x128xbf16>
    %cst_25 = arith.constant dense<0.000000e+00> : vector<256x128xf32>
    %40 = tpu.matmul %37, %39, %cst_25 {dimension_numbers = #tpu.dot_dimension_numbers<[1], [0], [0], [1], [0, 0, 1, 1], [], []>} : vector<256x8xbf16>, vector<8x128xbf16>, vector<256x128xf32> -> vector<256x128xf32>
    %41 = arith.addf %36, %40 : vector<256x128xf32>
    %42 = vector.extract_strided_slice %4 {offsets = [32, 0], sizes = [256, 8], strides = [1, 1]} : vector<288x8xbf16> to vector<256x8xbf16>
    %c6 = arith.constant 6 : index
    %c0_26 = arith.constant 0 : index
    %c0_27 = arith.constant 0 : index
    %43 = vector.load %arg3[%c6, %c0_26, %c0_27] : memref<9x8x128xbf16, #tpu.memory_space<vmem>>, vector<1x8x128xbf16>
    %44 = vector.shape_cast %43 : vector<1x8x128xbf16> to vector<8x128xbf16>
    %cst_28 = arith.constant dense<0.000000e+00> : vector<256x128xf32>
    %45 = tpu.matmul %42, %44, %cst_28 {dimension_numbers = #tpu.dot_dimension_numbers<[1], [0], [0], [1], [0, 0, 1, 1], [], []>} : vector<256x8xbf16>, vector<8x128xbf16>, vector<256x128xf32> -> vector<256x128xf32>
    %46 = arith.addf %41, %45 : vector<256x128xf32>
    %47 = vector.extract_strided_slice %8 {offsets = [32, 0], sizes = [256, 8], strides = [1, 1]} : vector<288x8xbf16> to vector<256x8xbf16>
    %c7 = arith.constant 7 : index
    %c0_29 = arith.constant 0 : index
    %c0_30 = arith.constant 0 : index
    %48 = vector.load %arg3[%c7, %c0_29, %c0_30] : memref<9x8x128xbf16, #tpu.memory_space<vmem>>, vector<1x8x128xbf16>
    %49 = vector.shape_cast %48 : vector<1x8x128xbf16> to vector<8x128xbf16>
    %cst_31 = arith.constant dense<0.000000e+00> : vector<256x128xf32>
    %50 = tpu.matmul %47, %49, %cst_31 {dimension_numbers = #tpu.dot_dimension_numbers<[1], [0], [0], [1], [0, 0, 1, 1], [], []>} : vector<256x8xbf16>, vector<8x128xbf16>, vector<256x128xf32> -> vector<256x128xf32>
    %51 = arith.addf %46, %50 : vector<256x128xf32>
    %52 = vector.extract_strided_slice %12 {offsets = [32, 0], sizes = [256, 8], strides = [1, 1]} : vector<288x8xbf16> to vector<256x8xbf16>
    %c8 = arith.constant 8 : index
    %c0_32 = arith.constant 0 : index
    %c0_33 = arith.constant 0 : index
    %53 = vector.load %arg3[%c8, %c0_32, %c0_33] : memref<9x8x128xbf16, #tpu.memory_space<vmem>>, vector<1x8x128xbf16>
    %54 = vector.shape_cast %53 : vector<1x8x128xbf16> to vector<8x128xbf16>
    %cst_34 = arith.constant dense<0.000000e+00> : vector<256x128xf32>
    %55 = tpu.matmul %52, %54, %cst_34 {dimension_numbers = #tpu.dot_dimension_numbers<[1], [0], [0], [1], [0, 0, 1, 1], [], []>} : vector<256x8xbf16>, vector<8x128xbf16>, vector<256x128xf32> -> vector<256x128xf32>
    %56 = arith.addf %51, %55 : vector<256x128xf32>
    %57 = vector.shape_cast %56 : vector<256x128xf32> to vector<32x8x128xf32>
    %cst_35 = arith.constant dense<0.000000e+00> : vector<8x128xf32>
    %58 = vector.multi_reduction <add>, %57, %cst_35 [0] : vector<32x8x128xf32> to vector<8x128xf32>
    %c0_36 = arith.constant 0 : index
    %c0_37 = arith.constant 0 : index
    %c0_38 = arith.constant 0 : index
    %c0_39 = arith.constant 0 : index
    %59 = vector.load %arg4[%c0_36, %c0_37, %c0_38, %c0_39] : memref<1x1x8x128xf32, #tpu.memory_space<vmem>>, vector<1x1x8x128xf32>
    %60 = vector.shape_cast %59 : vector<1x1x8x128xf32> to vector<8x128xf32>
    %61 = vector.shape_cast %58 : vector<8x128xf32> to vector<1x1x8x128xf32>
    tpu.vector_store %arg4[%c0_36, %c0_37, %c0_38, %c0_39], %61 {strides = array<i32>} : memref<1x1x8x128xf32, #tpu.memory_space<vmem>>, vector<1x1x8x128xf32>,
    %62 = arith.mulf %57, %57 : vector<32x8x128xf32>
    %cst_40 = arith.constant dense<0.000000e+00> : vector<8x128xf32>
    %63 = vector.multi_reduction <add>, %62, %cst_40 [0] : vector<32x8x128xf32> to vector<8x128xf32>
    %c0_41 = arith.constant 0 : index
    %c0_42 = arith.constant 0 : index
    %c0_43 = arith.constant 0 : index
    %c0_44 = arith.constant 0 : index
    %64 = vector.load %arg5[%c0_41, %c0_42, %c0_43, %c0_44] : memref<1x1x8x128xf32, #tpu.memory_space<vmem>>, vector<1x1x8x128xf32>
    %65 = vector.shape_cast %64 : vector<1x1x8x128xf32> to vector<8x128xf32>
    %66 = vector.shape_cast %63 : vector<8x128xf32> to vector<1x1x8x128xf32>
    tpu.vector_store %arg5[%c0_41, %c0_42, %c0_43, %c0_44], %66 {strides = array<i32>} : memref<1x1x8x128xf32, #tpu.memory_space<vmem>>, vector<1x1x8x128xf32>,
    return
  }
  func.func @transform_0(%arg0: i32, %arg1: i32) -> (i32, i32, i32, i32) {
    %c0_i32 = arith.constant 0 : i32
    %c0_i32_0 = arith.constant 0 : i32
    %c0_i32_1 = arith.constant 0 : i32
    %c0_i32_2 = arith.constant 0 : i32
    return %arg0, %c0_i32, %c0_i32_0, %c0_i32_1 : i32, i32, i32, i32
  }
  func.func @transform_1(%arg0: i32, %arg1: i32) -> (i32, i32, i32) {
    %c0_i32 = arith.constant 0 : i32
    %c0_i32_0 = arith.constant 0 : i32
    %c0_i32_1 = arith.constant 0 : i32
    %c0_i32_2 = arith.constant 0 : i32
    return %c0_i32, %c0_i32_0, %c0_i32_1 : i32, i32, i32
  }
  func.func @transform_2(%arg0: i32, %arg1: i32) -> (i32, i32, i32, i32) {
    %c0_i32 = arith.constant 0 : i32
    %c0_i32_0 = arith.constant 0 : i32
    %c0_i32_1 = arith.constant 0 : i32
    return %arg0, %arg1, %c0_i32, %c0_i32_0 : i32, i32, i32, i32
  }
  func.func @transform_3(%arg0: i32, %arg1: i32) -> (i32, i32, i32, i32) {
    %c0_i32 = arith.constant 0 : i32
    %c0_i32_0 = arith.constant 0 : i32
    %c0_i32_1 = arith.constant 0 : i32
    return %arg0, %arg1, %c0_i32, %c0_i32_0 : i32, i32, i32, i32
  }
}

</mosaic_0001>

<llo_original>
// kernel: tpu_custom_call.1
$region0: #{tpu_custom_call.1}
  #allocation0 [shape = 'u32[]', space=smem, size = 0x4, offset = 0x4, fixed_abs, tag = 'smem constant byte address 0x4 - core index']
  #allocation1 [shape = 'u32[144,128]{1,0:T(1,128)}', space=vmem, size = 0x12000, scoped, tag = 'internal scratch']
  %s0 = inlined_call_operand.vmem [shape: bf16[2,18,18,8], index: 0, kind: input, shape index: {}]
  %s1 = inlined_call_operand.vmem [shape: bf16[9,8,128], index: 1, kind: input, shape index: {}]
  %s2 = inlined_call_operand.hbm [shape: f32[2,1,8,128], index: 2, kind: output, shape index: {0}]
  %s3 = inlined_call_operand.hbm [shape: f32[2,1,8,128], index: 3, kind: output, shape index: {1}]
  %4 = xla_tuple %s2, %s3
  %s5 = sld [smem:[#allocation0]]
  $region49: #{tpu_custom_call.1} parent=0
    _
  %s7 = ssub.s32 1, %s5
  %s8 = scalar_select 0, %s7, %s5
  $region1: #{tpu_custom_call.1} parent=0
    #allocation2 [shape = 'u8[8192]{0}', space=vmem, size = 0x2000, scoped, tag = 'output window, operand 0']
    #allocation3 [shape = 's32[2]{0}', space=sflag, size = 0x8, scoped, tag = 'scoped memory for tpu_custom_call.1']
    #allocation4 [shape = 'u8[8192]{0}', space=vmem, size = 0x2000, scoped, tag = 'output window, operand 1']
    #allocation5 [shape = 's32[2]{0}', space=sflag, size = 0x8, scoped, tag = 'scoped memory for tpu_custom_call.1']
    %9 = vsyncpa [#allocation3], 0
    %s10 = scalar_lea.sflag [#allocation3], 1
    %11 = vsyncpa %s10, 0
    %12 = vsyncpa [#allocation5], 0
    %s13 = scalar_lea.sflag [#allocation5], 1
    %14 = vsyncpa %s13, 0
    loop: start=0, step=1, limit=4
    $region2: #{tpu_custom_call.1} parent=1 // loop_pre_header
      _
    $region3: #{tpu_custom_call.1} parent=1 // loop_header
      %s16 = sphi 0, %s20
      %p17 = scmp.ge.s32.totalorder %s16, 4
      %s23 = sphi 0, %s35
      %s24 = sphi 0, %s31
      %s25 = sphi 0, %s23
      %s26 = sphi 0, %s24
      %s27 = sphi 0, %s25
      %s28 = sphi 0, %s26
      %s38 = sphi 0, %s40
      %s41 = sphi 0, %s38
      %s42 = sphi 0, %s41
      %s58 = sphi 0, %s42
      %s62 = sphi 0, %s62
      %s64 = sphi 0, %s62
      %s65 = sphi 0, %s64
      %s79 = sphi 0, %s65
      %s87 = sphi 0, %s89
      %s90 = sphi 0, %s87
      %s91 = sphi 0, %s90
      %s107 = sphi 0, %s91
      %s115 = sphi 0, %s117
      %s118 = sphi 0, %s115
      %s119 = sphi 0, %s118
      %s135 = sphi 0, %s119
    $region4: #{tpu_custom_call.1} parent=1 // loop_header_branch
      %19 = sbr.rel (%p17) target = $region8
    $region5: #{tpu_custom_call.1} parent=1 // loop_body
      %s21 = ssub.s32 %s16, 1
      %s22 = ssub.s32 %s16, 2
      %s29 = sadd.s32 1, %s24
      %p30 = scmp.ge.s32.totalorder %s29, 1
      %s31 = scalar_select %p30, 0, %s29
      %s32 = sadd.s32 1, %s23
      %s33 = scalar_select %p30, %s32, %s23
      %p34 = scmp.ge.s32.totalorder %s33, 2
      %s35 = scalar_select %p34, 0, %s33
      %s36 = ssub.s32 %s23, %s35
      %p37 = scmp.eq.s32.totalorder %s36, 0
      %s39 = sadd.s32 %s38, 1
      %s40 = scalar_select %p37, %s38, %s39
      %p43 = pneg %p37
      %p44 = scmp.eq.s32.totalorder %s16, 1
      %p45 = por %p43, %p44
      %p46 = scmp.ne.s32.totalorder %s38, %s41
      %p47 = scmp.eq.s32.totalorder %s16, 0
      %p48 = por %p46, %p47
      %p49 = scmp.ne.s32.totalorder %s38, %s41
      %p50 = scmp.eq.s32.totalorder %s21, 1
      %p51 = por %p49, %p50
      %p52 = scmp.ne.s32.totalorder %s41, %s42
      %p53 = scmp.eq.s32.totalorder %s21, 0
      %p54 = por %p52, %p53
      %p55 = scmp.ne.s32.totalorder %s41, %s42
      %p56 = scmp.eq.s32.totalorder %s22, 1
      %p57 = por %p55, %p56
      %p59 = scmp.ne.s32.totalorder %s42, %s58
      %p60 = scmp.eq.s32.totalorder %s22, 0
      %p61 = por %p59, %p60
      %s63 = sadd.s32 %s62, 1
      %p66 = scmp.eq.s32.totalorder %s16, 1
      %p67 = scmp.ne.s32.totalorder %s62, %s64
      %p68 = scmp.eq.s32.totalorder %s16, 0
      %p69 = por %p67, %p68
      %p70 = scmp.ne.s32.totalorder %s62, %s64
      %p71 = scmp.eq.s32.totalorder %s21, 1
      %p72 = por %p70, %p71
      %p73 = scmp.ne.s32.totalorder %s64, %s65
      %p74 = scmp.eq.s32.totalorder %s21, 0
      %p75 = por %p73, %p74
      %p76 = scmp.ne.s32.totalorder %s64, %s65
      %p77 = scmp.eq.s32.totalorder %s22, 1
      %p78 = por %p76, %p77
      %p80 = scmp.ne.s32.totalorder %s65, %s79
      %p81 = scmp.eq.s32.totalorder %s22, 0
      %p82 = por %p80, %p81
      %s83 = ssub.s32 %s23, %s35
      %s84 = ssub.s32 %s24, %s31
      %s85 = sor.u32 %s83, %s84
      %p86 = scmp.eq.s32.totalorder %s85, 0
      %s88 = sadd.s32 %s87, 1
      %s89 = scalar_select %p86, %s87, %s88
      %p92 = pneg %p86
      %p93 = scmp.eq.s32.totalorder %s16, 1
      %p94 = por %p92, %p93
      %p95 = scmp.ne.s32.totalorder %s87, %s90
      %p96 = scmp.eq.s32.totalorder %s16, 0
      %p97 = por %p95, %p96
      %p98 = scmp.ne.s32.totalorder %s87, %s90
      %p99 = scmp.eq.s32.totalorder %s21, 1
      %p100 = por %p98, %p99
      %p101 = scmp.ne.s32.totalorder %s90, %s91
      %p102 = scmp.eq.s32.totalorder %s21, 0
      %p103 = por %p101, %p102
      %p104 = scmp.ne.s32.totalorder %s90, %s91
      %p105 = scmp.eq.s32.totalorder %s22, 1
      %p106 = por %p104, %p105
      %p108 = scmp.ne.s32.totalorder %s91, %s107
      %p109 = scmp.eq.s32.totalorder %s22, 0
      %p110 = por %p108, %p109
      %s111 = ssub.s32 %s23, %s35
      %s112 = ssub.s32 %s24, %s31
      %s113 = sor.u32 %s111, %s112
      %p114 = scmp.eq.s32.totalorder %s113, 0
      %s116 = sadd.s32 %s115, 1
      %s117 = scalar_select %p114, %s115, %s116
      %p120 = pneg %p114
      %p121 = scmp.eq.s32.totalorder %s16, 1
      %p122 = por %p120, %p121
      %p123 = scmp.ne.s32.totalorder %s115, %s118
      %p124 = scmp.eq.s32.totalorder %s16, 0
      %p125 = por %p123, %p124
      %p126 = scmp.ne.s32.totalorder %s115, %s118
      %p127 = scmp.eq.s32.totalorder %s21, 1
      %p128 = por %p126, %p127
      %p129 = scmp.ne.s32.totalorder %s118, %s119
      %p130 = scmp.eq.s32.totalorder %s21, 0
      %p131 = por %p129, %p130
      %p132 = scmp.ne.s32.totalorder %s118, %s119
      %p133 = scmp.eq.s32.totalorder %s22, 1
      %p134 = por %p132, %p133
      %p136 = scmp.ne.s32.totalorder %s119, %s135
      %p137 = scmp.eq.s32.totalorder %s22, 0
      %p138 = por %p136, %p137
      %p139 = scmp.le.s32.totalorder 1, %s16
      %p140 = scmp.lt.s32.totalorder %s16, 3
      %p141 = pnand %p139, %p140
      %p142 = pneg %p141
      // Predicated region
      $region9: #{tpu_custom_call.1} parent=5 // pred_check
        _
      $region10: #{tpu_custom_call.1} parent=5 // pred_check_branch
        %144 = sbr.rel (%p141) target = $region12
      $region11: #{tpu_custom_call.1} parent=5 // pred_region
        %s145 = ssub.s32 %s16, 1
        // Predicated region
        $region13: #{tpu_custom_call.1} parent=11 // pred_check
          %p146 = pneg %p75
        $region14: #{tpu_custom_call.1} parent=11 // pred_check_branch
          %148 = sbr.rel (%p146) target = $region16
        $region15: #{tpu_custom_call.1} parent=11 // pred_region
          _
        $region16: #{tpu_custom_call.1} parent=11 // pred_fallthru
          _
      $region12: #{tpu_custom_call.1} parent=5 // pred_fallthru
        _
      %p149 = scmp.lt.s32.totalorder %s16, 2
      // Predicated region
      $region17: #{tpu_custom_call.1} parent=5 // pred_check
        %p150 = pneg %p149
      $region18: #{tpu_custom_call.1} parent=5 // pred_check_branch
        %152 = sbr.rel (%p150) target = $region20
      $region19: #{tpu_custom_call.1} parent=5 // pred_region
        // Predicated region
        $region21: #{tpu_custom_call.1} parent=19 // pred_check
          %p153 = pneg %p48
        $region22: #{tpu_custom_call.1} parent=19 // pred_check_branch
          %155 = sbr.rel (%p153) target = $region24
        $region23: #{tpu_custom_call.1} parent=19 // pred_region
          %p156 = scmp.lt.s32.totalorder %s23, 1
          %s157 = scalar_select %p156, %s23, 1
          %s158 = smul.addr %s157, 54
          %s159 = smul.addr %s158, 4
          %s160 = scalar_lea.vmem %s0, %s159
        $region24: #{tpu_custom_call.1} parent=19 // pred_fallthru
          _
      $region20: #{tpu_custom_call.1} parent=5 // pred_fallthru
        _
      %p161 = scmp.le.s32.totalorder 1, %s16
      %p162 = scmp.lt.s32.totalorder %s16, 3
      %p163 = pnand %p161, %p162
      %p164 = pneg %p163
      // Predicated region
      $region25: #{tpu_custom_call.1} parent=5 // pred_check
        _
      $region26: #{tpu_custom_call.1} parent=5 // pred_check_branch
        %166 = sbr.rel (%p163) target = $region28
      $region27: #{tpu_custom_call.1} parent=5 // pred_region
        %s167 = ssub.s32 %s16, 1
        %p168 = scmp.lt.s32.totalorder %s25, 1
        %s169 = scalar_select %p168, %s25, 1
        %s170 = smul.addr %s169, 54
        %s171 = smul.addr %s170, 4
        %s172 = scalar_lea.vmem %s0, %s171
        %p173 = pneg %p54
        %p174 = pneg %p51
        %p175 = pneg %p75
        %p176 = pneg %p72
        %p177 = pneg %p103
        %p178 = pneg %p100
        %s179 = sand.u32 %s90, 1
        %s180 = scalar_lea.sflag [#allocation3], %s179
        %s181 = sand.u32 %s90, 1
        %s182 = smul.addr %s181, 8
        %s183 = scalar_lea.vmem [#allocation2], %s182
        %p184 = pneg %p131
        %p185 = pneg %p128
        %s186 = sand.u32 %s118, 1
        %s187 = scalar_lea.sflag [#allocation5], %s186
        %s188 = sand.u32 %s118, 1
        %s189 = smul.addr %s188, 8
        %s190 = scalar_lea.vmem [#allocation4], %s189
        %p191 = scmp.lt.s32.totalorder %s25, 1
        %s192 = scalar_select %p191, %s25, 1
        %s193 = smul.addr %s192, 54
        %s194 = smul.addr %s193, 4
        %s195 = scalar_lea.vmem %s0, %s194
        %s197 = smul.u32 %s26, 16
        %s198 = smul.u32 %s197, 3
        %s199 = smul.addr %s198, 4
        %s200 = scalar_lea.vmem %s195, %s199
        %v201 = vld [vmem:[%s200] sm:$0xf]
        %v202 = vld [vmem:[%s200 + $0x4] sm:$0xf]
        %v203 = vld [vmem:[%s200 + $0xc] sm:$0xf]
        %v204 = vld [vmem:[%s200 + $0x10] sm:$0xf]
        %v205 = vld [vmem:[%s200 + $0x18] sm:$0xf]
        %v206 = vld [vmem:[%s200 + $0x1c] sm:$0xf]
        %v207 = vld [vmem:[%s200 + $0x24] sm:$0xf]
        %v208 = vld [vmem:[%s200 + $0x28] sm:$0xf]
        %v209 = vld [vmem:[%s200 + $0x30] sm:$0xf]
        %v210 = vld [vmem:[%s200 + $0x34] sm:$0xf]
        %v211 = vld [vmem:[%s200 + $0x3c] sm:$0xf]
        %v212 = vld [vmem:[%s200 + $0x40] sm:$0xf]
        %v213 = vld [vmem:[%s200 + $0x48] sm:$0xf]
        %v214 = vld [vmem:[%s200 + $0x4c] sm:$0xf]
        %v215 = vld [vmem:[%s200 + $0x54] sm:$0xf]
        %v216 = vld [vmem:[%s200 + $0x58] sm:$0xf]
        %v217 = vld [vmem:[%s200 + $0x60] sm:$0xf]
        %v218 = vld [vmem:[%s200 + $0x64] sm:$0xf]
        %v219 = vld [vmem:[%s200 + $0x6c] sm:$0xf]
        %v220 = vld [vmem:[%s200 + $0x70] sm:$0xf]
        %v221 = vld [vmem:[%s200 + $0x78] sm:$0xf]
        %v222 = vld [vmem:[%s200 + $0x7c] sm:$0xf]
        %v223 = vld [vmem:[%s200 + $0x84] sm:$0xf]
        %v224 = vld [vmem:[%s200 + $0x88] sm:$0xf]
        %v225 = vld [vmem:[%s200 + $0x90] sm:$0xf]
        %v226 = vld [vmem:[%s200 + $0x94] sm:$0xf]
        %v227 = vld [vmem:[%s200 + $0x9c] sm:$0xf]
        %v228 = vld [vmem:[%s200 + $0xa0] sm:$0xf]
        %v229 = vld [vmem:[%s200 + $0xa8] sm:$0xf]
        %v230 = vld [vmem:[%s200 + $0xac] sm:$0xf]
        %v231 = vld [vmem:[%s200 + $0xb4] sm:$0xf]
        %v232 = vld [vmem:[%s200 + $0xb8] sm:$0xf]
        %v233 = vld [vmem:[%s200 + $0xc0] sm:$0xf]
        %v234 = vld [vmem:[%s200 + $0xc4] sm:$0xf]
        %v235 = vld [vmem:[%s200 + $0xcc] sm:$0xf]
        %v236 = vld [vmem:[%s200 + $0xd0] sm:$0xf]
        %v237 = vld [vmem:[%s200 + $0x8] sm:$0x1]
        %v238 = vld [vmem:[%s200 + $0x14] sm:$0x1]
        %v239 = vld [vmem:[%s200 + $0x20] sm:$0x1]
        %v240 = vld [vmem:[%s200 + $0x2c] sm:$0x1]
        %v241 = vld [vmem:[%s200 + $0x38] sm:$0x1]
        %v242 = vld [vmem:[%s200 + $0x44] sm:$0x1]
        %v243 = vld [vmem:[%s200 + $0x50] sm:$0x1]
        %v244 = vld [vmem:[%s200 + $0x5c] sm:$0x1]
        %v245 = vld [vmem:[%s200 + $0x68] sm:$0x1]
        %v246 = vld [vmem:[%s200 + $0x74] sm:$0x1]
        %v247 = vld [vmem:[%s200 + $0x80] sm:$0x1]
        %v248 = vld [vmem:[%s200 + $0x8c] sm:$0x1]
        %v249 = vld [vmem:[%s200 + $0x98] sm:$0x1]
        %v250 = vld [vmem:[%s200 + $0xa4] sm:$0x1]
        %v251 = vld [vmem:[%s200 + $0xb0] sm:$0x1]
        %v252 = vld [vmem:[%s200 + $0xbc] sm:$0x1]
        %v253 = vld [vmem:[%s200 + $0xc8] sm:$0x1]
        %v254 = vld [vmem:[%s200 + $0xd4] sm:$0x1]
        %vm255 = vsmask.f32 3328
        %vm256 = vsmask.f32 7440
        %vm257 = vmor %vm255, %vm256
        %v259 = vshrl.u32 %v201, 16
        %v261 = vrot.slane %v259, 4
        %v262 = vshll.u32 %v201, 16
        %v264 = vrot.slane %v262, 5
        %v265 = vor.u32 %v261, %v264
        %v266 = vrot.slane %v265, 4
        %v268 = vshll.u32 %v202, 16
        %v270 = vrot.slane %v268, 5
        %v271 = vsel %vm257, %v266, %v270
        %v272 = vshrl.u32 %v202, 16
        %v274 = vrot.slane %v272, 4
        %v275 = vor.u32 %v274, %v270
        %v276 = vrot.slane %v275, 4
        %v278 = vshll.u32 %v237, 16
        %v280 = vrot.slane %v278, 5
        %v281 = vsel %vm257, %v276, %v280
        %v283 = vshrl.u32 %v203, 16
        %v285 = vrot.slane %v283, 4
        %v286 = vshll.u32 %v203, 16
        %v288 = vrot.slane %v286, 5
        %v289 = vor.u32 %v285, %v288
        %v290 = vrot.slane %v289, 4
        %v292 = vshll.u32 %v204, 16
        %v294 = vrot.slane %v292, 5
        %v295 = vsel %vm257, %v290, %v294
        %v296 = vshrl.u32 %v204, 16
        %v298 = vrot.slane %v296, 4
        %v299 = vor.u32 %v298, %v294
        %v300 = vrot.slane %v299, 4
        %v302 = vshll.u32 %v238, 16
        %v304 = vrot.slane %v302, 5
        %v305 = vsel %vm257, %v300, %v304
        %v307 = vshrl.u32 %v205, 16
        %v309 = vrot.slane %v307, 4
        %v310 = vshll.u32 %v205, 16
        %v312 = vrot.slane %v310, 5
        %v313 = vor.u32 %v309, %v312
        %v314 = vrot.slane %v313, 4
        %v316 = vshll.u32 %v206, 16
        %v318 = vrot.slane %v316, 5
        %v319 = vsel %vm257, %v314, %v318
        %v320 = vshrl.u32 %v206, 16
        %v322 = vrot.slane %v320, 4
        %v323 = vor.u32 %v322, %v318
        %v324 = vrot.slane %v323, 4
        %v326 = vshll.u32 %v239, 16
        %v328 = vrot.slane %v326, 5
        %v329 = vsel %vm257, %v324, %v328
        %v331 = vshrl.u32 %v207, 16
        %v333 = vrot.slane %v331, 4
        %v334 = vshll.u32 %v207, 16
        %v336 = vrot.slane %v334, 5
        %v337 = vor.u32 %v333, %v336
        %v338 = vrot.slane %v337, 4
        %v340 = vshll.u32 %v208, 16
        %v342 = vrot.slane %v340, 5
        %v343 = vsel %vm257, %v338, %v342
        %v344 = vshrl.u32 %v208, 16
        %v346 = vrot.slane %v344, 4
        %v347 = vor.u32 %v346, %v342
        %v348 = vrot.slane %v347, 4
        %v350 = vshll.u32 %v240, 16
        %v352 = vrot.slane %v350, 5
        %v353 = vsel %vm257, %v348, %v352
        %v355 = vshrl.u32 %v209, 16
        %v357 = vrot.slane %v355, 4
        %v358 = vshll.u32 %v209, 16
        %v360 = vrot.slane %v358, 5
        %v361 = vor.u32 %v357, %v360
        %v362 = vrot.slane %v361, 4
        %v364 = vshll.u32 %v210, 16
        %v366 = vrot.slane %v364, 5
        %v367 = vsel %vm257, %v362, %v366
        %v368 = vshrl.u32 %v210, 16
        %v370 = vrot.slane %v368, 4
        %v371 = vor.u32 %v370, %v366
        %v372 = vrot.slane %v371, 4
        %v374 = vshll.u32 %v241, 16
        %v376 = vrot.slane %v374, 5
        %v377 = vsel %vm257, %v372, %v376
        %v379 = vshrl.u32 %v211, 16
        %v381 = vrot.slane %v379, 4
        %v382 = vshll.u32 %v211, 16
        %v384 = vrot.slane %v382, 5
        %v385 = vor.u32 %v381, %v384
        %v386 = vrot.slane %v385, 4
        %v388 = vshll.u32 %v212, 16
        %v390 = vrot.slane %v388, 5
        %v391 = vsel %vm257, %v386, %v390
        %v392 = vshrl.u32 %v212, 16
        %v394 = vrot.slane %v392, 4
        %v395 = vor.u32 %v394, %v390
        %v396 = vrot.slane %v395, 4
        %v398 = vshll.u32 %v242, 16
        %v400 = vrot.slane %v398, 5
        %v401 = vsel %vm257, %v396, %v400
        %v403 = vshrl.u32 %v213, 16
        %v405 = vrot.slane %v403, 4
        %v406 = vshll.u32 %v213, 16
        %v408 = vrot.slane %v406, 5
        %v409 = vor.u32 %v405, %v408
        %v410 = vrot.slane %v409, 4
        %v412 = vshll.u32 %v214, 16
        %v414 = vrot.slane %v412, 5
        %v415 = vsel %vm257, %v410, %v414
        %v416 = vshrl.u32 %v214, 16
        %v418 = vrot.slane %v416, 4
        %v419 = vor.u32 %v418, %v414
        %v420 = vrot.slane %v419, 4
        %v422 = vshll.u32 %v243, 16
        %v424 = vrot.slane %v422, 5
        %v425 = vsel %vm257, %v420, %v424
        %v427 = vshrl.u32 %v215, 16
        %v429 = vrot.slane %v427, 4
        %v430 = vshll.u32 %v215, 16
        %v432 = vrot.slane %v430, 5
        %v433 = vor.u32 %v429, %v432
        %v434 = vrot.slane %v433, 4
        %v436 = vshll.u32 %v216, 16
        %v438 = vrot.slane %v436, 5
        %v439 = vsel %vm257, %v434, %v438
        %v440 = vshrl.u32 %v216, 16
        %v442 = vrot.slane %v440, 4
        %v443 = vor.u32 %v442, %v438
        %v444 = vrot.slane %v443, 4
        %v446 = vshll.u32 %v244, 16
        %v448 = vrot.slane %v446, 5
        %v449 = vsel %vm257, %v444, %v448
        %v451 = vshrl.u32 %v217, 16
        %v453 = vrot.slane %v451, 4
        %v454 = vshll.u32 %v217, 16
        %v456 = vrot.slane %v454, 5
        %v457 = vor.u32 %v453, %v456
        %v458 = vrot.slane %v457, 4
        %v460 = vshll.u32 %v218, 16
        %v462 = vrot.slane %v460, 5
        %v463 = vsel %vm257, %v458, %v462
        %v464 = vshrl.u32 %v218, 16
        %v466 = vrot.slane %v464, 4
        %v467 = vor.u32 %v466, %v462
        %v468 = vrot.slane %v467, 4
        %v470 = vshll.u32 %v245, 16
        %v472 = vrot.slane %v470, 5
        %v473 = vsel %vm257, %v468, %v472
        %v475 = vshrl.u32 %v219, 16
        %v477 = vrot.slane %v475, 4
        %v478 = vshll.u32 %v219, 16
        %v480 = vrot.slane %v478, 5
        %v481 = vor.u32 %v477, %v480
        %v482 = vrot.slane %v481, 4
        %v484 = vshll.u32 %v220, 16
        %v486 = vrot.slane %v484, 5
        %v487 = vsel %vm257, %v482, %v486
        %v488 = vshrl.u32 %v220, 16
        %v490 = vrot.slane %v488, 4
        %v491 = vor.u32 %v490, %v486
        %v492 = vrot.slane %v491, 4
        %v494 = vshll.u32 %v246, 16
        %v496 = vrot.slane %v494, 5
        %v497 = vsel %vm257, %v492, %v496
        %v499 = vshrl.u32 %v221, 16
        %v501 = vrot.slane %v499, 4
        %v502 = vshll.u32 %v221, 16
        %v504 = vrot.slane %v502, 5
        %v505 = vor.u32 %v501, %v504
        %v506 = vrot.slane %v505, 4
        %v508 = vshll.u32 %v222, 16
        %v510 = vrot.slane %v508, 5
        %v511 = vsel %vm257, %v506, %v510
        %v512 = vshrl.u32 %v222, 16
        %v514 = vrot.slane %v512, 4
        %v515 = vor.u32 %v514, %v510
        %v516 = vrot.slane %v515, 4
        %v518 = vshll.u32 %v247, 16
        %v520 = vrot.slane %v518, 5
        %v521 = vsel %vm257, %v516, %v520
        %v523 = vshrl.u32 %v223, 16
        %v525 = vrot.slane %v523, 4
        %v526 = vshll.u32 %v223, 16
        %v528 = vrot.slane %v526, 5
        %v529 = vor.u32 %v525, %v528
        %v530 = vrot.slane %v529, 4
        %v532 = vshll.u32 %v224, 16
        %v534 = vrot.slane %v532, 5
        %v535 = vsel %vm257, %v530, %v534
        %v536 = vshrl.u32 %v224, 16
        %v538 = vrot.slane %v536, 4
        %v539 = vor.u32 %v538, %v534
        %v540 = vrot.slane %v539, 4
        %v542 = vshll.u32 %v248, 16
        %v544 = vrot.slane %v542, 5
        %v545 = vsel %vm257, %v540, %v544
        %v547 = vshrl.u32 %v225, 16
        %v549 = vrot.slane %v547, 4
        %v550 = vshll.u32 %v225, 16
        %v552 = vrot.slane %v550, 5
        %v553 = vor.u32 %v549, %v552
        %v554 = vrot.slane %v553, 4
        %v556 = vshll.u32 %v226, 16
        %v558 = vrot.slane %v556, 5
        %v559 = vsel %vm257, %v554, %v558
        %v560 = vshrl.u32 %v226, 16
        %v562 = vrot.slane %v560, 4
        %v563 = vor.u32 %v562, %v558
        %v564 = vrot.slane %v563, 4
        %v566 = vshll.u32 %v249, 16
        %v568 = vrot.slane %v566, 5
        %v569 = vsel %vm257, %v564, %v568
        %v571 = vshrl.u32 %v227, 16
        %v573 = vrot.slane %v571, 4
        %v574 = vshll.u32 %v227, 16
        %v576 = vrot.slane %v574, 5
        %v577 = vor.u32 %v573, %v576
        %v578 = vrot.slane %v577, 4
        %v580 = vshll.u32 %v228, 16
        %v582 = vrot.slane %v580, 5
        %v583 = vsel %vm257, %v578, %v582
        %v584 = vshrl.u32 %v228, 16
        %v586 = vrot.slane %v584, 4
        %v587 = vor.u32 %v586, %v582
        %v588 = vrot.slane %v587, 4
        %v590 = vshll.u32 %v250, 16
        %v592 = vrot.slane %v590, 5
        %v593 = vsel %vm257, %v588, %v592
        %v595 = vshrl.u32 %v229, 16
        %v597 = vrot.slane %v595, 4
        %v598 = vshll.u32 %v229, 16
        %v600 = vrot.slane %v598, 5
        %v601 = vor.u32 %v597, %v600
        %v602 = vrot.slane %v601, 4
        %v604 = vshll.u32 %v230, 16
        %v606 = vrot.slane %v604, 5
        %v607 = vsel %vm257, %v602, %v606
        %v608 = vshrl.u32 %v230, 16
        %v610 = vrot.slane %v608, 4
        %v611 = vor.u32 %v610, %v606
        %v612 = vrot.slane %v611, 4
        %v614 = vshll.u32 %v251, 16
        %v616 = vrot.slane %v614, 5
        %v617 = vsel %vm257, %v612, %v616
        %v619 = vshrl.u32 %v231, 16
        %v621 = vrot.slane %v619, 4
        %v622 = vshll.u32 %v231, 16
        %v624 = vrot.slane %v622, 5
        %v625 = vor.u32 %v621, %v624
        %v626 = vrot.slane %v625, 4
        %v628 = vshll.u32 %v232, 16
        %v630 = vrot.slane %v628, 5
        %v631 = vsel %vm257, %v626, %v630
        %v632 = vshrl.u32 %v232, 16
        %v634 = vrot.slane %v632, 4
        %v635 = vor.u32 %v634, %v630
        %v636 = vrot.slane %v635, 4
        %v638 = vshll.u32 %v252, 16
        %v640 = vrot.slane %v638, 5
        %v641 = vsel %vm257, %v636, %v640
        %v643 = vshrl.u32 %v233, 16
        %v645 = vrot.slane %v643, 4
        %v646 = vshll.u32 %v233, 16
        %v648 = vrot.slane %v646, 5
        %v649 = vor.u32 %v645, %v648
        %v650 = vrot.slane %v649, 4
        %v652 = vshll.u32 %v234, 16
        %v654 = vrot.slane %v652, 5
        %v655 = vsel %vm257, %v650, %v654
        %v656 = vshrl.u32 %v234, 16
        %v658 = vrot.slane %v656, 4
        %v659 = vor.u32 %v658, %v654
        %v660 = vrot.slane %v659, 4
        %v662 = vshll.u32 %v253, 16
        %v664 = vrot.slane %v662, 5
        %v665 = vsel %vm257, %v660, %v664
        %v667 = vshrl.u32 %v235, 16
        %v669 = vrot.slane %v667, 4
        %v670 = vshll.u32 %v235, 16
        %v672 = vrot.slane %v670, 5
        %v673 = vor.u32 %v669, %v672
        %v674 = vrot.slane %v673, 4
        %v676 = vshll.u32 %v236, 16
        %v678 = vrot.slane %v676, 5
        %v679 = vsel %vm257, %v674, %v678
        %v680 = vshrl.u32 %v236, 16
        %v682 = vrot.slane %v680, 4
        %v683 = vor.u32 %v682, %v678
        %v684 = vrot.slane %v683, 4
        %v686 = vshll.u32 %v254, 16
        %v688 = vrot.slane %v686, 5
        %v689 = vsel %vm257, %v684, %v688
        %v690 = vld [vmem:[%s200] sm:$0xe]
        %v691 = vld [vmem:[%s200 + $0xc] sm:$0xe]
        %v692 = vld [vmem:[%s200 + $0x18] sm:$0xe]
        %v693 = vld [vmem:[%s200 + $0x24] sm:$0xe]
        %v694 = vld [vmem:[%s200 + $0x30] sm:$0xe]
        %v695 = vld [vmem:[%s200 + $0x3c] sm:$0xe]
        %v696 = vld [vmem:[%s200 + $0x48] sm:$0xe]
        %v697 = vld [vmem:[%s200 + $0x54] sm:$0xe]
        %v698 = vld [vmem:[%s200 + $0x60] sm:$0xe]
        %v699 = vld [vmem:[%s200 + $0x6c] sm:$0xe]
        %v700 = vld [vmem:[%s200 + $0x78] sm:$0xe]
        %v701 = vld [vmem:[%s200 + $0x84] sm:$0xe]
        %v702 = vld [vmem:[%s200 + $0x90] sm:$0xe]
        %v703 = vld [vmem:[%s200 + $0x9c] sm:$0xe]
        %v704 = vld [vmem:[%s200 + $0xa8] sm:$0xe]
        %v705 = vld [vmem:[%s200 + $0xb4] sm:$0xe]
        %v706 = vld [vmem:[%s200 + $0xc0] sm:$0xe]
        %v707 = vld [vmem:[%s200 + $0xcc] sm:$0xe]
        %vm762 = vcmask 1042432
        %vm763 = vcmask 1046532
        %vm764 = vmor %vm762, %vm763
        %v765 = vrot.slane %v690, 5
        %v766 = vrot.slane %v765, 4
        %v767 = vrot.slane %v202, 5
        %v768 = vsel %vm764, %v766, %v767
        %v769 = vrot.slane %v767, 4
        %v770 = vrot.slane %v237, 5
        %v771 = vsel %vm764, %v769, %v770
        %v772 = vrot.slane %v691, 5
        %v773 = vrot.slane %v772, 4
        %v774 = vrot.slane %v204, 5
        %v775 = vsel %vm764, %v773, %v774
        %v776 = vrot.slane %v774, 4
        %v777 = vrot.slane %v238, 5
        %v778 = vsel %vm764, %v776, %v777
        %v779 = vrot.slane %v692, 5
        %v780 = vrot.slane %v779, 4
        %v781 = vrot.slane %v206, 5
        %v782 = vsel %vm764, %v780, %v781
        %v783 = vrot.slane %v781, 4
        %v784 = vrot.slane %v239, 5
        %v785 = vsel %vm764, %v783, %v784
        %v786 = vrot.slane %v693, 5
        %v787 = vrot.slane %v786, 4
        %v788 = vrot.slane %v208, 5
        %v789 = vsel %vm764, %v787, %v788
        %v790 = vrot.slane %v788, 4
        %v791 = vrot.slane %v240, 5
        %v792 = vsel %vm764, %v790, %v791
        %v793 = vrot.slane %v694, 5
        %v794 = vrot.slane %v793, 4
        %v795 = vrot.slane %v210, 5
        %v796 = vsel %vm764, %v794, %v795
        %v797 = vrot.slane %v795, 4
        %v798 = vrot.slane %v241, 5
        %v799 = vsel %vm764, %v797, %v798
        %v800 = vrot.slane %v695, 5
        %v801 = vrot.slane %v800, 4
        %v802 = vrot.slane %v212, 5
        %v803 = vsel %vm764, %v801, %v802
        %v804 = vrot.slane %v802, 4
        %v805 = vrot.slane %v242, 5
        %v806 = vsel %vm764, %v804, %v805
        %v807 = vrot.slane %v696, 5
        %v808 = vrot.slane %v807, 4
        %v809 = vrot.slane %v214, 5
        %v810 = vsel %vm764, %v808, %v809
        %v811 = vrot.slane %v809, 4
        %v812 = vrot.slane %v243, 5
        %v813 = vsel %vm764, %v811, %v812
        %v814 = vrot.slane %v697, 5
        %v815 = vrot.slane %v814, 4
        %v816 = vrot.slane %v216, 5
        %v817 = vsel %vm764, %v815, %v816
        %v818 = vrot.slane %v816, 4
        %v819 = vrot.slane %v244, 5
        %v820 = vsel %vm764, %v818, %v819
        %v821 = vrot.slane %v698, 5
        %v822 = vrot.slane %v821, 4
        %v823 = vrot.slane %v218, 5
        %v824 = vsel %vm764, %v822, %v823
        %v825 = vrot.slane %v823, 4
        %v826 = vrot.slane %v245, 5
        %v827 = vsel %vm764, %v825, %v826
        %v828 = vrot.slane %v699, 5
        %v829 = vrot.slane %v828, 4
        %v830 = vrot.slane %v220, 5
        %v831 = vsel %vm764, %v829, %v830
        %v832 = vrot.slane %v830, 4
        %v833 = vrot.slane %v246, 5
        %v834 = vsel %vm764, %v832, %v833
        %v835 = vrot.slane %v700, 5
        %v836 = vrot.slane %v835, 4
        %v837 = vrot.slane %v222, 5
        %v838 = vsel %vm764, %v836, %v837
        %v839 = vrot.slane %v837, 4
        %v840 = vrot.slane %v247, 5
        %v841 = vsel %vm764, %v839, %v840
        %v842 = vrot.slane %v701, 5
        %v843 = vrot.slane %v842, 4
        %v844 = vrot.slane %v224, 5
        %v845 = vsel %vm764, %v843, %v844
        %v846 = vrot.slane %v844, 4
        %v847 = vrot.slane %v248, 5
        %v848 = vsel %vm764, %v846, %v847
        %v849 = vrot.slane %v702, 5
        %v850 = vrot.slane %v849, 4
        %v851 = vrot.slane %v226, 5
        %v852 = vsel %vm764, %v850, %v851
        %v853 = vrot.slane %v851, 4
        %v854 = vrot.slane %v249, 5
        %v855 = vsel %vm764, %v853, %v854
        %v856 = vrot.slane %v703, 5
        %v857 = vrot.slane %v856, 4
        %v858 = vrot.slane %v228, 5
        %v859 = vsel %vm764, %v857, %v858
        %v860 = vrot.slane %v858, 4
        %v861 = vrot.slane %v250, 5
        %v862 = vsel %vm764, %v860, %v861
        %v863 = vrot.slane %v704, 5
        %v864 = vrot.slane %v863, 4
        %v865 = vrot.slane %v230, 5
        %v866 = vsel %vm764, %v864, %v865
        %v867 = vrot.slane %v865, 4
        %v868 = vrot.slane %v251, 5
        %v869 = vsel %vm764, %v867, %v868
        %v870 = vrot.slane %v705, 5
        %v871 = vrot.slane %v870, 4
        %v872 = vrot.slane %v232, 5
        %v873 = vsel %vm764, %v871, %v872
        %v874 = vrot.slane %v872, 4
        %v875 = vrot.slane %v252, 5
        %v876 = vsel %vm764, %v874, %v875
        %v877 = vrot.slane %v706, 5
        %v878 = vrot.slane %v877, 4
        %v879 = vrot.slane %v234, 5
        %v880 = vsel %vm764, %v878, %v879
        %v881 = vrot.slane %v879, 4
        %v882 = vrot.slane %v253, 5
        %v883 = vsel %vm764, %v881, %v882
        %v884 = vrot.slane %v707, 5
        %v885 = vrot.slane %v884, 4
        %v886 = vrot.slane %v236, 5
        %v887 = vsel %vm764, %v885, %v886
        %v888 = vrot.slane %v886, 4
        %v889 = vrot.slane %v254, 5
        %v890 = vsel %vm764, %v888, %v889
        %v891 = vld [vmem:[%s1] sm:$0xf]
        %s892 = scalar_lea.vmem %s1, 4
        %v893 = vld [vmem:[%s892] sm:$0xf]
        %v894 = vunpack.c.l.b16 %v271
        %v895 = vunpack.c.l.b16 %v281
        %v896 = vunpack.c.l.b16 %v295
        %v897 = vunpack.c.l.b16 %v305
        %v898 = vunpack.c.l.b16 %v319
        %v899 = vunpack.c.l.b16 %v329
        %v900 = vunpack.c.l.b16 %v343
        %v901 = vunpack.c.l.b16 %v353
        %v902 = vunpack.c.l.b16 %v367
        %v903 = vunpack.c.l.b16 %v377
        %v904 = vunpack.c.l.b16 %v391
        %v905 = vunpack.c.l.b16 %v401
        %v906 = vunpack.c.l.b16 %v415
        %v907 = vunpack.c.l.b16 %v425
        %v908 = vunpack.c.l.b16 %v439
        %v909 = vunpack.c.l.b16 %v449
        %v910 = vunpack.c.l.b16 %v463
        %v911 = vunpack.c.l.b16 %v473
        %v912 = vunpack.c.l.b16 %v487
        %v913 = vunpack.c.l.b16 %v497
        %v914 = vunpack.c.l.b16 %v511
        %v915 = vunpack.c.l.b16 %v521
        %v916 = vunpack.c.l.b16 %v535
        %v917 = vunpack.c.l.b16 %v545
        %v918 = vunpack.c.l.b16 %v559
        %v919 = vunpack.c.l.b16 %v569
        %v920 = vunpack.c.l.b16 %v583
        %v921 = vunpack.c.l.b16 %v593
        %v922 = vunpack.c.l.b16 %v607
        %v923 = vunpack.c.l.b16 %v617
        %v924 = vunpack.c.l.b16 %v631
        %v925 = vunpack.c.l.b16 %v641
        %v926 = vpack.c.b16 %v895, %v894
        %v927 = vpack.c.b16 %v897, %v896
        %v928 = vpack.c.b16 %v899, %v898
        %v929 = vpack.c.b16 %v901, %v900
        %v930 = vpack.c.b16 %v903, %v902
        %v931 = vpack.c.b16 %v905, %v904
        %v932 = vpack.c.b16 %v907, %v906
        %v933 = vpack.c.b16 %v909, %v908
        %v934 = vpack.c.b16 %v911, %v910
        %v935 = vpack.c.b16 %v913, %v912
        %v936 = vpack.c.b16 %v915, %v914
        %v937 = vpack.c.b16 %v917, %v916
        %v938 = vpack.c.b16 %v919, %v918
        %v939 = vpack.c.b16 %v921, %v920
        %v940 = vpack.c.b16 %v923, %v922
        %v941 = vpack.c.b16 %v925, %v924
        %vm942 = vcmask 64512
        %v944 = vsel %vm942, %v926, 0
        %v947 = vsel %vm942, %v927, 0
        %v950 = vsel %vm942, %v928, 0
        %v953 = vsel %vm942, %v929, 0
        %v956 = vsel %vm942, %v930, 0
        %v959 = vsel %vm942, %v931, 0
        %v962 = vsel %vm942, %v932, 0
        %v965 = vsel %vm942, %v933, 0
        %v968 = vsel %vm942, %v934, 0
        %v971 = vsel %vm942, %v935, 0
        %v974 = vsel %vm942, %v936, 0
        %v977 = vsel %vm942, %v937, 0
        %v980 = vsel %vm942, %v938, 0
        %v983 = vsel %vm942, %v939, 0
        %v986 = vsel %vm942, %v940, 0
        %v989 = vsel %vm942, %v941, 0
        %vm991 = vcmask 1043456
        %v993 = vsel %vm991, %v893, 0
        %995 = vmatprep.subr.bf16.mxu0 0
        %996 = vmatpush1.bf16.msra.mxu0 %v993
        %997 = vmatprep.subr.bf16.mxu0 0
        %998 = vmatpush1.bf16.msra.mxu0 0
        %999 = vmatprep.subr.bf16.mxu0 0
        %1000 = vmatpush1.bf16.msra.mxu0 0
        %1001 = vmatprep.subr.bf16.mxu0 0
        %1002 = vmatpush1.bf16.msra.mxu0 0
        %1003 = vmatprep.subr.bf16.mxu0 0
        %1004 = vmatpush1.bf16.msra.mxu0 0
        %1005 = vmatprep.subr.bf16.mxu0 0
        %1006 = vmatpush1.bf16.msra.mxu0 0
        %1007 = vmatprep.subr.bf16.mxu0 0
        %1008 = vmatpush1.bf16.msra.mxu0 0
        %1009 = vmatprep.subr.bf16.mxu0 0
        %1010 = vmatpush1.bf16.msra.mxu0 0
        %1011 = vmatprep.subr.bf16.mxu0 0
        %1012 = vmatpush1.bf16.msra.mxu0 0
        %1013 = vmatprep.subr.bf16.mxu0 0
        %1014 = vmatpush1.bf16.msra.mxu0 0
        %1015 = vmatprep.subr.bf16.mxu0 0
        %1016 = vmatpush1.bf16.msra.mxu0 0
        %1017 = vmatprep.subr.bf16.mxu0 0
        %1018 = vmatpush1.bf16.msra.mxu0 0
        %1019 = vmatprep.subr.bf16.mxu0 0
        %1020 = vmatpush1.bf16.msra.mxu0 0
        %1021 = vmatprep.subr.bf16.mxu0 0
        %1022 = vmatpush1.bf16.msra.mxu0 0
        %1023 = vmatprep.subr.bf16.mxu0 0
        %1024 = vmatpush1.bf16.msra.mxu0 0
        %1025 = vmatprep.subr.bf16.mxu0 0
        %1026 = vmatpush1.bf16.msra.mxu0 0
        %1027 = vmatprep.mubr.bf16.mxu0 0
        %1028 = vmatmul.mubr.bf16.gmra.mrb[0].mxu0 %v944
        %v1029 = vpop.f32.mrb[0].mxu0
        %v1030 = vadd.f32 0.0, %v1029
        %v1031 = vpop.f32.mrb[0].mxu0
        %v1032 = vpop.f32.mrb[0].mxu0
        %v1033 = vadd.f32 0.0, %v1032
        %v1034 = vpop.f32.mrb[0].mxu0
        %1035 = vmatprep.mubr.bf16.mxu0 0
        %1036 = vmatmul.mubr.bf16.gmra.mrb[0].mxu0 %v947
        %v1037 = vpop.f32.mrb[0].mxu0
        %v1038 = vadd.f32 0.0, %v1037
        %v1039 = vpop.f32.mrb[0].mxu0
        %v1040 = vpop.f32.mrb[0].mxu0
        %v1041 = vadd.f32 0.0, %v1040
        %v1042 = vpop.f32.mrb[0].mxu0
        %1043 = vmatprep.mubr.bf16.mxu0 0
        %1044 = vmatmul.mubr.bf16.gmra.mrb[0].mxu0 %v950
        %v1045 = vpop.f32.mrb[0].mxu0
        %v1046 = vadd.f32 0.0, %v1045
        %v1047 = vpop.f32.mrb[0].mxu0
        %v1048 = vpop.f32.mrb[0].mxu0
        %v1049 = vadd.f32 0.0, %v1048
        %v1050 = vpop.f32.mrb[0].mxu0
        %1051 = vmatprep.mubr.bf16.mxu0 0
        %1052 = vmatmul.mubr.bf16.gmra.mrb[0].mxu0 %v953
        %v1053 = vpop.f32.mrb[0].mxu0
        %v1054 = vadd.f32 0.0, %v1053
        %v1055 = vpop.f32.mrb[0].mxu0
        %v1056 = vpop.f32.mrb[0].mxu0
        %v1057 = vadd.f32 0.0, %v1056
        %v1058 = vpop.f32.mrb[0].mxu0
        %1059 = vmatprep.mubr.bf16.mxu0 0
        %1060 = vmatmul.mubr.bf16.gmra.mrb[0].mxu0 %v956
        %v1061 = vpop.f32.mrb[0].mxu0
        %v1062 = vadd.f32 0.0, %v1061
        %v1063 = vpop.f32.mrb[0].mxu0
        %v1064 = vpop.f32.mrb[0].mxu0
        %v1065 = vadd.f32 0.0, %v1064
        %v1066 = vpop.f32.mrb[0].mxu0
        %1067 = vmatprep.mubr.bf16.mxu0 0
        %1068 = vmatmul.mubr.bf16.gmra.mrb[0].mxu0 %v959
        %v1069 = vpop.f32.mrb[0].mxu0
        %v1070 = vadd.f32 0.0, %v1069
        %v1071 = vpop.f32.mrb[0].mxu0
        %v1072 = vpop.f32.mrb[0].mxu0
        %v1073 = vadd.f32 0.0, %v1072
        %v1074 = vpop.f32.mrb[0].mxu0
        %1075 = vmatprep.mubr.bf16.mxu0 0
        %1076 = vmatmul.mubr.bf16.gmra.mrb[0].mxu0 %v962
        %v1077 = vpop.f32.mrb[0].mxu0
        %v1078 = vadd.f32 0.0, %v1077
        %v1079 = vpop.f32.mrb[0].mxu0
        %v1080 = vpop.f32.mrb[0].mxu0
        %v1081 = vadd.f32 0.0, %v1080
        %v1082 = vpop.f32.mrb[0].mxu0
        %1083 = vmatprep.mubr.bf16.mxu0 0
        %1084 = vmatmul.mubr.bf16.gmra.mrb[0].mxu0 %v965
        %v1085 = vpop.f32.mrb[0].mxu0
        %v1086 = vadd.f32 0.0, %v1085
        %v1087 = vpop.f32.mrb[0].mxu0
        %v1088 = vpop.f32.mrb[0].mxu0
        %v1089 = vadd.f32 0.0, %v1088
        %v1090 = vpop.f32.mrb[0].mxu0
        %1091 = vmatprep.mubr.bf16.mxu0 0
        %1092 = vmatmul.mubr.bf16.gmra.mrb[0].mxu0 %v968
        %v1093 = vpop.f32.mrb[0].mxu0
        %v1094 = vadd.f32 0.0, %v1093
        %v1095 = vpop.f32.mrb[0].mxu0
        %v1096 = vpop.f32.mrb[0].mxu0
        %v1097 = vadd.f32 0.0, %v1096
        %v1098 = vpop.f32.mrb[0].mxu0
        %1099 = vmatprep.mubr.bf16.mxu0 0
        %1100 = vmatmul.mubr.bf16.gmra.mrb[0].mxu0 %v971
        %v1101 = vpop.f32.mrb[0].mxu0
        %v1102 = vadd.f32 0.0, %v1101
        %v1103 = vpop.f32.mrb[0].mxu0
        %v1104 = vpop.f32.mrb[0].mxu0
        %v1105 = vadd.f32 0.0, %v1104
        %v1106 = vpop.f32.mrb[0].mxu0
        %1107 = vmatprep.mubr.bf16.mxu0 0
        %1108 = vmatmul.mubr.bf16.gmra.mrb[0].mxu0 %v974
        %v1109 = vpop.f32.mrb[0].mxu0
        %v1110 = vadd.f32 0.0, %v1109
        %v1111 = vpop.f32.mrb[0].mxu0
        %v1112 = vpop.f32.mrb[0].mxu0
        %v1113 = vadd.f32 0.0, %v1112
        %v1114 = vpop.f32.mrb[0].mxu0
        %1115 = vmatprep.mubr.bf16.mxu0 0
        %1116 = vmatmul.mubr.bf16.gmra.mrb[0].mxu0 %v977
        %v1117 = vpop.f32.mrb[0].mxu0
        %v1118 = vadd.f32 0.0, %v1117
        %v1119 = vpop.f32.mrb[0].mxu0
        %v1120 = vpop.f32.mrb[0].mxu0
        %v1121 = vadd.f32 0.0, %v1120
        %v1122 = vpop.f32.mrb[0].mxu0
        %1123 = vmatprep.mubr.bf16.mxu0 0
        %1124 = vmatmul.mubr.bf16.gmra.mrb[0].mxu0 %v980
        %v1125 = vpop.f32.mrb[0].mxu0
        %v1126 = vadd.f32 0.0, %v1125
        %v1127 = vpop.f32.mrb[0].mxu0
        %v1128 = vpop.f32.mrb[0].mxu0
        %v1129 = vadd.f32 0.0, %v1128
        %v1130 = vpop.f32.mrb[0].mxu0
        %1131 = vmatprep.mubr.bf16.mxu0 0
        %1132 = vmatmul.mubr.bf16.gmra.mrb[0].mxu0 %v983
        %v1133 = vpop.f32.mrb[0].mxu0
        %v1134 = vadd.f32 0.0, %v1133
        %v1135 = vpop.f32.mrb[0].mxu0
        %v1136 = vpop.f32.mrb[0].mxu0
        %v1137 = vadd.f32 0.0, %v1136
        %v1138 = vpop.f32.mrb[0].mxu0
        %1139 = vmatprep.mubr.bf16.mxu0 0
        %1140 = vmatmul.mubr.bf16.gmra.mrb[0].mxu0 %v986
        %v1141 = vpop.f32.mrb[0].mxu0
        %v1142 = vadd.f32 0.0, %v1141
        %v1143 = vpop.f32.mrb[0].mxu0
        %v1144 = vpop.f32.mrb[0].mxu0
        %v1145 = vadd.f32 0.0, %v1144
        %v1146 = vpop.f32.mrb[0].mxu0
        %1147 = vmatprep.mubr.bf16.mxu0 0
        %1148 = vmatmul.mubr.bf16.gmra.mrb[0].mxu0 %v989
        %v1149 = vpop.f32.mrb[0].mxu0
        %v1150 = vadd.f32 0.0, %v1149
        %v1151 = vpop.f32.mrb[0].mxu0
        %v1152 = vpop.f32.mrb[0].mxu0
        %v1153 = vadd.f32 0.0, %v1152
        %v1154 = vpop.f32.mrb[0].mxu0
        %1155 = vdwg.mxu0
        %v1172 = vunpack.c.l.b16 %v201
        %v1173 = vunpack.c.l.b16 %v202
        %v1174 = vunpack.c.l.b16 %v203
        %v1175 = vunpack.c.l.b16 %v204
        %v1176 = vunpack.c.l.b16 %v205
        %v1177 = vunpack.c.l.b16 %v206
        %v1178 = vunpack.c.l.b16 %v207
        %v1179 = vunpack.c.l.b16 %v208
        %v1180 = vunpack.c.l.b16 %v209
        %v1181 = vunpack.c.l.b16 %v210
        %v1182 = vunpack.c.l.b16 %v211
        %v1183 = vunpack.c.l.b16 %v212
        %v1184 = vunpack.c.l.b16 %v213
        %v1185 = vunpack.c.l.b16 %v214
        %v1186 = vunpack.c.l.b16 %v215
        %v1187 = vunpack.c.l.b16 %v216
        %v1188 = vunpack.c.l.b16 %v217
        %v1189 = vunpack.c.l.b16 %v218
        %v1190 = vunpack.c.l.b16 %v219
        %v1191 = vunpack.c.l.b16 %v220
        %v1192 = vunpack.c.l.b16 %v221
        %v1193 = vunpack.c.l.b16 %v222
        %v1194 = vunpack.c.l.b16 %v223
        %v1195 = vunpack.c.l.b16 %v224
        %v1196 = vunpack.c.l.b16 %v225
        %v1197 = vunpack.c.l.b16 %v226
        %v1198 = vunpack.c.l.b16 %v227
        %v1199 = vunpack.c.l.b16 %v228
        %v1200 = vunpack.c.l.b16 %v229
        %v1201 = vunpack.c.l.b16 %v230
        %v1202 = vunpack.c.l.b16 %v231
        %v1203 = vunpack.c.l.b16 %v232
        %v1204 = vpack.c.b16 %v1173, %v1172
        %v1205 = vpack.c.b16 %v1175, %v1174
        %v1206 = vpack.c.b16 %v1177, %v1176
        %v1207 = vpack.c.b16 %v1179, %v1178
        %v1208 = vpack.c.b16 %v1181, %v1180
        %v1209 = vpack.c.b16 %v1183, %v1182
        %v1210 = vpack.c.b16 %v1185, %v1184
        %v1211 = vpack.c.b16 %v1187, %v1186
        %v1212 = vpack.c.b16 %v1189, %v1188
        %v1213 = vpack.c.b16 %v1191, %v1190
        %v1214 = vpack.c.b16 %v1193, %v1192
        %v1215 = vpack.c.b16 %v1195, %v1194
        %v1216 = vpack.c.b16 %v1197, %v1196
        %v1217 = vpack.c.b16 %v1199, %v1198
        %v1218 = vpack.c.b16 %v1201, %v1200
        %v1219 = vpack.c.b16 %v1203, %v1202
        %v1221 = vsel %vm942, %v1204, 0
        %v1224 = vsel %vm942, %v1205, 0
        %v1227 = vsel %vm942, %v1206, 0
        %v1230 = vsel %vm942, %v1207, 0
        %v1233 = vsel %vm942, %v1208, 0
        %v1236 = vsel %vm942, %v1209, 0
        %v1239 = vsel %vm942, %v1210, 0
        %v1242 = vsel %vm942, %v1211, 0
        %v1245 = vsel %vm942, %v1212, 0
        %v1248 = vsel %vm942, %v1213, 0
        %v1251 = vsel %vm942, %v1214, 0
        %v1254 = vsel %vm942, %v1215, 0
        %v1257 = vsel %vm942, %v1216, 0
        %v1260 = vsel %vm942, %v1217, 0
        %v1263 = vsel %vm942, %v1218, 0
        %v1266 = vsel %vm942, %v1219, 0
        %v1269 = vsel %vm991, %v891, 0
        %1271 = vmatprep.subr.bf16.mxu0 0
        %1272 = vmatpush1.bf16.msra.mxu0 %v1269
        %1273 = vmatprep.subr.bf16.mxu0 0
        %1274 = vmatpush1.bf16.msra.mxu0 0
        %1275 = vmatprep.subr.bf16.mxu0 0
        %1276 = vmatpush1.bf16.msra.mxu0 0
        %1277 = vmatprep.subr.bf16.mxu0 0
        %1278 = vmatpush1.bf16.msra.mxu0 0
        %1279 = vmatprep.subr.bf16.mxu0 0
        %1280 = vmatpush1.bf16.msra.mxu0 0
        %1281 = vmatprep.subr.bf16.mxu0 0
        %1282 = vmatpush1.bf16.msra.mxu0 0
        %1283 = vmatprep.subr.bf16.mxu0 0
        %1284 = vmatpush1.bf16.msra.mxu0 0
        %1285 = vmatprep.subr.bf16.mxu0 0
        %1286 = vmatpush1.bf16.msra.mxu0 0
        %1287 = vmatprep.subr.bf16.mxu0 0
        %1288 = vmatpush1.bf16.msra.mxu0 0
        %1289 = vmatprep.subr.bf16.mxu0 0
        %1290 = vmatpush1.bf16.msra.mxu0 0
        %1291 = vmatprep.subr.bf16.mxu0 0
        %1292 = vmatpush1.bf16.msra.mxu0 0
        %1293 = vmatprep.subr.bf16.mxu0 0
        %1294 = vmatpush1.bf16.msra.mxu0 0
        %1295 = vmatprep.subr.bf16.mxu0 0
        %1296 = vmatpush1.bf16.msra.mxu0 0
        %1297 = vmatprep.subr.bf16.mxu0 0
        %1298 = vmatpush1.bf16.msra.mxu0 0
        %1299 = vmatprep.subr.bf16.mxu0 0
        %1300 = vmatpush1.bf16.msra.mxu0 0
        %1301 = vmatprep.subr.bf16.mxu0 0
        %1302 = vmatpush1.bf16.msra.mxu0 0
        %1303 = vmatprep.mubr.bf16.mxu0 0
        %1304 = vmatmul.mubr.bf16.gmra.mrb[0].mxu0 %v1221
        %v1305 = vpop.f32.mrb[0].mxu0
        %v1306 = vadd.f32 %v1030, %v1305
        %v1307 = vpop.f32.mrb[0].mxu0
        %v1308 = vpop.f32.mrb[0].mxu0
        %v1309 = vadd.f32 %v1033, %v1308
        %v1310 = vpop.f32.mrb[0].mxu0
        %1311 = vmatprep.mubr.bf16.mxu0 0
        %1312 = vmatmul.mubr.bf16.gmra.mrb[0].mxu0 %v1224
        %v1313 = vpop.f32.mrb[0].mxu0
        %v1314 = vadd.f32 %v1038, %v1313
        %v1315 = vpop.f32.mrb[0].mxu0
        %v1316 = vpop.f32.mrb[0].mxu0
        %v1317 = vadd.f32 %v1041, %v1316
        %v1318 = vpop.f32.mrb[0].mxu0
        %1319 = vmatprep.mubr.bf16.mxu0 0
        %1320 = vmatmul.mubr.bf16.gmra.mrb[0].mxu0 %v1227
        %v1321 = vpop.f32.mrb[0].mxu0
        %v1322 = vadd.f32 %v1046, %v1321
        %v1323 = vpop.f32.mrb[0].mxu0
        %v1324 = vpop.f32.mrb[0].mxu0
        %v1325 = vadd.f32 %v1049, %v1324
        %v1326 = vpop.f32.mrb[0].mxu0
        %1327 = vmatprep.mubr.bf16.mxu0 0
        %1328 = vmatmul.mubr.bf16.gmra.mrb[0].mxu0 %v1230
        %v1329 = vpop.f32.mrb[0].mxu0
        %v1330 = vadd.f32 %v1054, %v1329
        %v1331 = vpop.f32.mrb[0].mxu0
        %v1332 = vpop.f32.mrb[0].mxu0
        %v1333 = vadd.f32 %v1057, %v1332
        %v1334 = vpop.f32.mrb[0].mxu0
        %1335 = vmatprep.mubr.bf16.mxu0 0
        %1336 = vmatmul.mubr.bf16.gmra.mrb[0].mxu0 %v1233
        %v1337 = vpop.f32.mrb[0].mxu0
        %v1338 = vadd.f32 %v1062, %v1337
        %v1339 = vpop.f32.mrb[0].mxu0
        %v1340 = vpop.f32.mrb[0].mxu0
        %v1341 = vadd.f32 %v1065, %v1340
        %v1342 = vpop.f32.mrb[0].mxu0
        %1343 = vmatprep.mubr.bf16.mxu0 0
        %1344 = vmatmul.mubr.bf16.gmra.mrb[0].mxu0 %v1236
        %v1345 = vpop.f32.mrb[0].mxu0
        %v1346 = vadd.f32 %v1070, %v1345
        %v1347 = vpop.f32.mrb[0].mxu0
        %v1348 = vpop.f32.mrb[0].mxu0
        %v1349 = vadd.f32 %v1073, %v1348
        %v1350 = vpop.f32.mrb[0].mxu0
        %1351 = vmatprep.mubr.bf16.mxu0 0
        %1352 = vmatmul.mubr.bf16.gmra.mrb[0].mxu0 %v1239
        %v1353 = vpop.f32.mrb[0].mxu0
        %v1354 = vadd.f32 %v1078, %v1353
        %v1355 = vpop.f32.mrb[0].mxu0
        %v1356 = vpop.f32.mrb[0].mxu0
        %v1357 = vadd.f32 %v1081, %v1356
        %v1358 = vpop.f32.mrb[0].mxu0
        %1359 = vmatprep.mubr.bf16.mxu0 0
        %1360 = vmatmul.mubr.bf16.gmra.mrb[0].mxu0 %v1242
        %v1361 = vpop.f32.mrb[0].mxu0
        %v1362 = vadd.f32 %v1086, %v1361
        %v1363 = vpop.f32.mrb[0].mxu0
        %v1364 = vpop.f32.mrb[0].mxu0
        %v1365 = vadd.f32 %v1089, %v1364
        %v1366 = vpop.f32.mrb[0].mxu0
        %1367 = vmatprep.mubr.bf16.mxu0 0
        %1368 = vmatmul.mubr.bf16.gmra.mrb[0].mxu0 %v1245
        %v1369 = vpop.f32.mrb[0].mxu0
        %v1370 = vadd.f32 %v1094, %v1369
        %v1371 = vpop.f32.mrb[0].mxu0
        %v1372 = vpop.f32.mrb[0].mxu0
        %v1373 = vadd.f32 %v1097, %v1372
        %v1374 = vpop.f32.mrb[0].mxu0
        %1375 = vmatprep.mubr.bf16.mxu0 0
        %1376 = vmatmul.mubr.bf16.gmra.mrb[0].mxu0 %v1248
        %v1377 = vpop.f32.mrb[0].mxu0
        %v1378 = vadd.f32 %v1102, %v1377
        %v1379 = vpop.f32.mrb[0].mxu0
        %v1380 = vpop.f32.mrb[0].mxu0
        %v1381 = vadd.f32 %v1105, %v1380
        %v1382 = vpop.f32.mrb[0].mxu0
        %1383 = vmatprep.mubr.bf16.mxu0 0
        %1384 = vmatmul.mubr.bf16.gmra.mrb[0].mxu0 %v1251
        %v1385 = vpop.f32.mrb[0].mxu0
        %v1386 = vadd.f32 %v1110, %v1385
        %v1387 = vpop.f32.mrb[0].mxu0
        %v1388 = vpop.f32.mrb[0].mxu0
        %v1389 = vadd.f32 %v1113, %v1388
        %v1390 = vpop.f32.mrb[0].mxu0
        %1391 = vmatprep.mubr.bf16.mxu0 0
        %1392 = vmatmul.mubr.bf16.gmra.mrb[0].mxu0 %v1254
        %v1393 = vpop.f32.mrb[0].mxu0
        %v1394 = vadd.f32 %v1118, %v1393
        %v1395 = vpop.f32.mrb[0].mxu0
        %v1396 = vpop.f32.mrb[0].mxu0
        %v1397 = vadd.f32 %v1121, %v1396
        %v1398 = vpop.f32.mrb[0].mxu0
        %1399 = vmatprep.mubr.bf16.mxu0 0
        %1400 = vmatmul.mubr.bf16.gmra.mrb[0].mxu0 %v1257
        %v1401 = vpop.f32.mrb[0].mxu0
        %v1402 = vadd.f32 %v1126, %v1401
        %v1403 = vpop.f32.mrb[0].mxu0
        %v1404 = vpop.f32.mrb[0].mxu0
        %v1405 = vadd.f32 %v1129, %v1404
        %v1406 = vpop.f32.mrb[0].mxu0
        %1407 = vmatprep.mubr.bf16.mxu0 0
        %1408 = vmatmul.mubr.bf16.gmra.mrb[0].mxu0 %v1260
        %v1409 = vpop.f32.mrb[0].mxu0
        %v1410 = vadd.f32 %v1134, %v1409
        %v1411 = vpop.f32.mrb[0].mxu0
        %v1412 = vpop.f32.mrb[0].mxu0
        %v1413 = vadd.f32 %v1137, %v1412
        %v1414 = vpop.f32.mrb[0].mxu0
        %1415 = vmatprep.mubr.bf16.mxu0 0
        %1416 = vmatmul.mubr.bf16.gmra.mrb[0].mxu0 %v1263
        %v1417 = vpop.f32.mrb[0].mxu0
        %v1418 = vadd.f32 %v1142, %v1417
        %v1419 = vpop.f32.mrb[0].mxu0
        %v1420 = vpop.f32.mrb[0].mxu0
        %v1421 = vadd.f32 %v1145, %v1420
        %v1422 = vpop.f32.mrb[0].mxu0
        %1423 = vmatprep.mubr.bf16.mxu0 0
        %1424 = vmatmul.mubr.bf16.gmra.mrb[0].mxu0 %v1266
        %v1425 = vpop.f32.mrb[0].mxu0
        %v1426 = vadd.f32 %v1150, %v1425
        %v1427 = vpop.f32.mrb[0].mxu0
        %v1428 = vpop.f32.mrb[0].mxu0
        %v1429 = vadd.f32 %v1153, %v1428
        %v1430 = vpop.f32.mrb[0].mxu0
        %1431 = vdwg.mxu0
        %s1432 = scalar_lea.vmem %s1, 8
        %v1433 = vld [vmem:[%s1432] sm:$0xf]
        %v1434 = vunpack.c.l.b16 %v768
        %v1435 = vunpack.c.l.b16 %v771
        %v1436 = vunpack.c.l.b16 %v775
        %v1437 = vunpack.c.l.b16 %v778
        %v1438 = vunpack.c.l.b16 %v782
        %v1439 = vunpack.c.l.b16 %v785
        %v1440 = vunpack.c.l.b16 %v789
        %v1441 = vunpack.c.l.b16 %v792
        %v1442 = vunpack.c.l.b16 %v796
        %v1443 = vunpack.c.l.b16 %v799
        %v1444 = vunpack.c.l.b16 %v803
        %v1445 = vunpack.c.l.b16 %v806
        %v1446 = vunpack.c.l.b16 %v810
        %v1447 = vunpack.c.l.b16 %v813
        %v1448 = vunpack.c.l.b16 %v817
        %v1449 = vunpack.c.l.b16 %v820
        %v1450 = vunpack.c.l.b16 %v824
        %v1451 = vunpack.c.l.b16 %v827
        %v1452 = vunpack.c.l.b16 %v831
        %v1453 = vunpack.c.l.b16 %v834
        %v1454 = vunpack.c.l.b16 %v838
        %v1455 = vunpack.c.l.b16 %v841
        %v1456 = vunpack.c.l.b16 %v845
        %v1457 = vunpack.c.l.b16 %v848
        %v1458 = vunpack.c.l.b16 %v852
        %v1459 = vunpack.c.l.b16 %v855
        %v1460 = vunpack.c.l.b16 %v859
        %v1461 = vunpack.c.l.b16 %v862
        %v1462 = vunpack.c.l.b16 %v866
        %v1463 = vunpack.c.l.b16 %v869
        %v1464 = vunpack.c.l.b16 %v873
        %v1465 = vunpack.c.l.b16 %v876
        %v1466 = vpack.c.b16 %v1435, %v1434
        %v1467 = vpack.c.b16 %v1437, %v1436
        %v1468 = vpack.c.b16 %v1439, %v1438
        %v1469 = vpack.c.b16 %v1441, %v1440
        %v1470 = vpack.c.b16 %v1443, %v1442
        %v1471 = vpack.c.b16 %v1445, %v1444
        %v1472 = vpack.c.b16 %v1447, %v1446
        %v1473 = vpack.c.b16 %v1449, %v1448
        %v1474 = vpack.c.b16 %v1451, %v1450
        %v1475 = vpack.c.b16 %v1453, %v1452
        %v1476 = vpack.c.b16 %v1455, %v1454
        %v1477 = vpack.c.b16 %v1457, %v1456
        %v1478 = vpack.c.b16 %v1459, %v1458
        %v1479 = vpack.c.b16 %v1461, %v1460
        %v1480 = vpack.c.b16 %v1463, %v1462
        %v1481 = vpack.c.b16 %v1465, %v1464
        %v1483 = vsel %vm942, %v1466, 0
        %v1486 = vsel %vm942, %v1467, 0
        %v1489 = vsel %vm942, %v1468, 0
        %v1492 = vsel %vm942, %v1469, 0
        %v1495 = vsel %vm942, %v1470, 0
        %v1498 = vsel %vm942, %v1471, 0
        %v1501 = vsel %vm942, %v1472, 0
        %v1504 = vsel %vm942, %v1473, 0
        %v1507 = vsel %vm942, %v1474, 0
        %v1510 = vsel %vm942, %v1475, 0
        %v1513 = vsel %vm942, %v1476, 0
        %v1516 = vsel %vm942, %v1477, 0
        %v1519 = vsel %vm942, %v1478, 0
        %v1522 = vsel %vm942, %v1479, 0
        %v1525 = vsel %vm942, %v1480, 0
        %v1528 = vsel %vm942, %v1481, 0
        %v1531 = vsel %vm991, %v1433, 0
        %1533 = vmatprep.subr.bf16.mxu0 0
        %1534 = vmatpush1.bf16.msra.mxu0 %v1531
        %1535 = vmatprep.subr.bf16.mxu0 0
        %1536 = vmatpush1.bf16.msra.mxu0 0
        %1537 = vmatprep.subr.bf16.mxu0 0
        %1538 = vmatpush1.bf16.msra.mxu0 0
        %1539 = vmatprep.subr.bf16.mxu0 0
        %1540 = vmatpush1.bf16.msra.mxu0 0
        %1541 = vmatprep.subr.bf16.mxu0 0
        %1542 = vmatpush1.bf16.msra.mxu0 0
        %1543 = vmatprep.subr.bf16.mxu0 0
        %1544 = vmatpush1.bf16.msra.mxu0 0
        %1545 = vmatprep.subr.bf16.mxu0 0
        %1546 = vmatpush1.bf16.msra.mxu0 0
        %1547 = vmatprep.subr.bf16.mxu0 0
        %1548 = vmatpush1.bf16.msra.mxu0 0
        %1549 = vmatprep.subr.bf16.mxu0 0
        %1550 = vmatpush1.bf16.msra.mxu0 0
        %1551 = vmatprep.subr.bf16.mxu0 0
        %1552 = vmatpush1.bf16.msra.mxu0 0
        %1553 = vmatprep.subr.bf16.mxu0 0
        %1554 = vmatpush1.bf16.msra.mxu0 0
        %1555 = vmatprep.subr.bf16.mxu0 0
        %1556 = vmatpush1.bf16.msra.mxu0 0
        %1557 = vmatprep.subr.bf16.mxu0 0
        %1558 = vmatpush1.bf16.msra.mxu0 0
        %1559 = vmatprep.subr.bf16.mxu0 0
        %1560 = vmatpush1.bf16.msra.mxu0 0
        %1561 = vmatprep.subr.bf16.mxu0 0
        %1562 = vmatpush1.bf16.msra.mxu0 0
        %1563 = vmatprep.subr.bf16.mxu0 0
        %1564 = vmatpush1.bf16.msra.mxu0 0
        %1565 = vmatprep.mubr.bf16.mxu0 0
        %1566 = vmatmul.mubr.bf16.gmra.mrb[0].mxu0 %v1483
        %v1567 = vpop.f32.mrb[0].mxu0
        %v1568 = vadd.f32 0.0, %v1567
        %v1569 = vpop.f32.mrb[0].mxu0
        %v1570 = vpop.f32.mrb[0].mxu0
        %v1571 = vadd.f32 0.0, %v1570
        %v1572 = vpop.f32.mrb[0].mxu0
        %1573 = vmatprep.mubr.bf16.mxu0 0
        %1574 = vmatmul.mubr.bf16.gmra.mrb[0].mxu0 %v1486
        %v1575 = vpop.f32.mrb[0].mxu0
        %v1576 = vadd.f32 0.0, %v1575
        %v1577 = vpop.f32.mrb[0].mxu0
        %v1578 = vpop.f32.mrb[0].mxu0
        %v1579 = vadd.f32 0.0, %v1578
        %v1580 = vpop.f32.mrb[0].mxu0
        %1581 = vmatprep.mubr.bf16.mxu0 0
        %1582 = vmatmul.mubr.bf16.gmra.mrb[0].mxu0 %v1489
        %v1583 = vpop.f32.mrb[0].mxu0
        %v1584 = vadd.f32 0.0, %v1583
        %v1585 = vpop.f32.mrb[0].mxu0
        %v1586 = vpop.f32.mrb[0].mxu0
        %v1587 = vadd.f32 0.0, %v1586
        %v1588 = vpop.f32.mrb[0].mxu0
        %1589 = vmatprep.mubr.bf16.mxu0 0
        %1590 = vmatmul.mubr.bf16.gmra.mrb[0].mxu0 %v1492
        %v1591 = vpop.f32.mrb[0].mxu0
        %v1592 = vadd.f32 0.0, %v1591
        %v1593 = vpop.f32.mrb[0].mxu0
        %v1594 = vpop.f32.mrb[0].mxu0
        %v1595 = vadd.f32 0.0, %v1594
        %v1596 = vpop.f32.mrb[0].mxu0
        %1597 = vmatprep.mubr.bf16.mxu0 0
        %1598 = vmatmul.mubr.bf16.gmra.mrb[0].mxu0 %v1495
        %v1599 = vpop.f32.mrb[0].mxu0
        %v1600 = vadd.f32 0.0, %v1599
        %v1601 = vpop.f32.mrb[0].mxu0
        %v1602 = vpop.f32.mrb[0].mxu0
        %v1603 = vadd.f32 0.0, %v1602
        %v1604 = vpop.f32.mrb[0].mxu0
        %1605 = vmatprep.mubr.bf16.mxu0 0
        %1606 = vmatmul.mubr.bf16.gmra.mrb[0].mxu0 %v1498
        %v1607 = vpop.f32.mrb[0].mxu0
        %v1608 = vadd.f32 0.0, %v1607
        %v1609 = vpop.f32.mrb[0].mxu0
        %v1610 = vpop.f32.mrb[0].mxu0
        %v1611 = vadd.f32 0.0, %v1610
        %v1612 = vpop.f32.mrb[0].mxu0
        %1613 = vmatprep.mubr.bf16.mxu0 0
        %1614 = vmatmul.mubr.bf16.gmra.mrb[0].mxu0 %v1501
        %v1615 = vpop.f32.mrb[0].mxu0
        %v1616 = vadd.f32 0.0, %v1615
        %v1617 = vpop.f32.mrb[0].mxu0
        %v1618 = vpop.f32.mrb[0].mxu0
        %v1619 = vadd.f32 0.0, %v1618
        %v1620 = vpop.f32.mrb[0].mxu0
        %1621 = vmatprep.mubr.bf16.mxu0 0
        %1622 = vmatmul.mubr.bf16.gmra.mrb[0].mxu0 %v1504
        %v1623 = vpop.f32.mrb[0].mxu0
        %v1624 = vadd.f32 0.0, %v1623
        %v1625 = vpop.f32.mrb[0].mxu0
        %v1626 = vpop.f32.mrb[0].mxu0
        %v1627 = vadd.f32 0.0, %v1626
        %v1628 = vpop.f32.mrb[0].mxu0
        %1629 = vmatprep.mubr.bf16.mxu0 0
        %1630 = vmatmul.mubr.bf16.gmra.mrb[0].mxu0 %v1507
        %v1631 = vpop.f32.mrb[0].mxu0
        %v1632 = vadd.f32 0.0, %v1631
        %v1633 = vpop.f32.mrb[0].mxu0
        %v1634 = vpop.f32.mrb[0].mxu0
        %v1635 = vadd.f32 0.0, %v1634
        %v1636 = vpop.f32.mrb[0].mxu0
        %1637 = vmatprep.mubr.bf16.mxu0 0
        %1638 = vmatmul.mubr.bf16.gmra.mrb[0].mxu0 %v1510
        %v1639 = vpop.f32.mrb[0].mxu0
        %v1640 = vadd.f32 0.0, %v1639
        %v1641 = vpop.f32.mrb[0].mxu0
        %v1642 = vpop.f32.mrb[0].mxu0
        %v1643 = vadd.f32 0.0, %v1642
        %v1644 = vpop.f32.mrb[0].mxu0
        %1645 = vmatprep.mubr.bf16.mxu0 0
        %1646 = vmatmul.mubr.bf16.gmra.mrb[0].mxu0 %v1513
        %v1647 = vpop.f32.mrb[0].mxu0
        %v1648 = vadd.f32 0.0, %v1647
        %v1649 = vpop.f32.mrb[0].mxu0
        %v1650 = vpop.f32.mrb[0].mxu0
        %v1651 = vadd.f32 0.0, %v1650
        %v1652 = vpop.f32.mrb[0].mxu0
        %1653 = vmatprep.mubr.bf16.mxu0 0
        %1654 = vmatmul.mubr.bf16.gmra.mrb[0].mxu0 %v1516
        %v1655 = vpop.f32.mrb[0].mxu0
        %v1656 = vadd.f32 0.0, %v1655
        %v1657 = vpop.f32.mrb[0].mxu0
        %v1658 = vpop.f32.mrb[0].mxu0
        %v1659 = vadd.f32 0.0, %v1658
        %v1660 = vpop.f32.mrb[0].mxu0
        %1661 = vmatprep.mubr.bf16.mxu0 0
        %1662 = vmatmul.mubr.bf16.gmra.mrb[0].mxu0 %v1519
        %v1663 = vpop.f32.mrb[0].mxu0
        %v1664 = vadd.f32 0.0, %v1663
        %v1665 = vpop.f32.mrb[0].mxu0
        %v1666 = vpop.f32.mrb[0].mxu0
        %v1667 = vadd.f32 0.0, %v1666
        %v1668 = vpop.f32.mrb[0].mxu0
        %1669 = vmatprep.mubr.bf16.mxu0 0
        %1670 = vmatmul.mubr.bf16.gmra.mrb[0].mxu0 %v1522
        %v1671 = vpop.f32.mrb[0].mxu0
        %v1672 = vadd.f32 0.0, %v1671
        %v1673 = vpop.f32.mrb[0].mxu0
        %v1674 = vpop.f32.mrb[0].mxu0
        %v1675 = vadd.f32 0.0, %v1674
        %v1676 = vpop.f32.mrb[0].mxu0
        %1677 = vmatprep.mubr.bf16.mxu0 0
        %1678 = vmatmul.mubr.bf16.gmra.mrb[0].mxu0 %v1525
        %v1679 = vpop.f32.mrb[0].mxu0
        %v1680 = vadd.f32 0.0, %v1679
        %v1681 = vpop.f32.mrb[0].mxu0
        %v1682 = vpop.f32.mrb[0].mxu0
        %v1683 = vadd.f32 0.0, %v1682
        %v1684 = vpop.f32.mrb[0].mxu0
        %1685 = vmatprep.mubr.bf16.mxu0 0
        %1686 = vmatmul.mubr.bf16.gmra.mrb[0].mxu0 %v1528
        %v1687 = vpop.f32.mrb[0].mxu0
        %v1688 = vadd.f32 0.0, %v1687
        %v1689 = vpop.f32.mrb[0].mxu0
        %v1690 = vpop.f32.mrb[0].mxu0
        %v1691 = vadd.f32 0.0, %v1690
        %v1692 = vpop.f32.mrb[0].mxu0
        %1693 = vdwg.mxu0
        %v1694 = vadd.f32 %v1306, %v1568
        %v1695 = vadd.f32 %v1309, %v1571
        %v1696 = vadd.f32 %v1314, %v1576
        %v1697 = vadd.f32 %v1317, %v1579
        %v1698 = vadd.f32 %v1322, %v1584
        %v1699 = vadd.f32 %v1325, %v1587
        %v1700 = vadd.f32 %v1330, %v1592
        %v1701 = vadd.f32 %v1333, %v1595
        %v1702 = vadd.f32 %v1338, %v1600
        %v1703 = vadd.f32 %v1341, %v1603
        %v1704 = vadd.f32 %v1346, %v1608
        %v1705 = vadd.f32 %v1349, %v1611
        %v1706 = vadd.f32 %v1354, %v1616
        %v1707 = vadd.f32 %v1357, %v1619
        %v1708 = vadd.f32 %v1362, %v1624
        %v1709 = vadd.f32 %v1365, %v1627
        %v1710 = vadd.f32 %v1370, %v1632
        %v1711 = vadd.f32 %v1373, %v1635
        %v1712 = vadd.f32 %v1378, %v1640
        %v1713 = vadd.f32 %v1381, %v1643
        %v1714 = vadd.f32 %v1386, %v1648
        %v1715 = vadd.f32 %v1389, %v1651
        %v1716 = vadd.f32 %v1394, %v1656
        %v1717 = vadd.f32 %v1397, %v1659
        %v1718 = vadd.f32 %v1402, %v1664
        %v1719 = vadd.f32 %v1405, %v1667
        %v1720 = vadd.f32 %v1410, %v1672
        %v1721 = vadd.f32 %v1413, %v1675
        %v1722 = vadd.f32 %v1418, %v1680
        %v1723 = vadd.f32 %v1421, %v1683
        %v1724 = vadd.f32 %v1426, %v1688
        %v1725 = vadd.f32 %v1429, %v1691
        %s1726 = scalar_lea.vmem %s1, 12
        %v1727 = vld [vmem:[%s1726] sm:$0xf]
        %v1729 = vunpack.c.l.b16 %v233
        %v1730 = vunpack.c.l.b16 %v234
        %v1731 = vpack.c.b16 %v1730, %v1729
        %v1733 = vsel %vm942, %v1731, 0
        %v1736 = vsel %vm991, %v1727, 0
        %1738 = vmatprep.subr.bf16.mxu0 0
        %1739 = vmatpush1.bf16.msra.mxu0 %v1736
        %1740 = vmatprep.subr.bf16.mxu0 0
        %1741 = vmatpush1.bf16.msra.mxu0 0
        %1742 = vmatprep.subr.bf16.mxu0 0
        %1743 = vmatpush1.bf16.msra.mxu0 0
        %1744 = vmatprep.subr.bf16.mxu0 0
        %1745 = vmatpush1.bf16.msra.mxu0 0
        %1746 = vmatprep.subr.bf16.mxu0 0
        %1747 = vmatpush1.bf16.msra.mxu0 0
        %1748 = vmatprep.subr.bf16.mxu0 0
        %1749 = vmatpush1.bf16.msra.mxu0 0
        %1750 = vmatprep.subr.bf16.mxu0 0
        %1751 = vmatpush1.bf16.msra.mxu0 0
        %1752 = vmatprep.subr.bf16.mxu0 0
        %1753 = vmatpush1.bf16.msra.mxu0 0
        %1754 = vmatprep.subr.bf16.mxu0 0
        %1755 = vmatpush1.bf16.msra.mxu0 0
        %1756 = vmatprep.subr.bf16.mxu0 0
        %1757 = vmatpush1.bf16.msra.mxu0 0
        %1758 = vmatprep.subr.bf16.mxu0 0
        %1759 = vmatpush1.bf16.msra.mxu0 0
        %1760 = vmatprep.subr.bf16.mxu0 0
        %1761 = vmatpush1.bf16.msra.mxu0 0
        %1762 = vmatprep.subr.bf16.mxu0 0
        %1763 = vmatpush1.bf16.msra.mxu0 0
        %1764 = vmatprep.subr.bf16.mxu0 0
        %1765 = vmatpush1.bf16.msra.mxu0 0
        %1766 = vmatprep.subr.bf16.mxu0 0
        %1767 = vmatpush1.bf16.msra.mxu0 0
        %1768 = vmatprep.subr.bf16.mxu0 0
        %1769 = vmatpush1.bf16.msra.mxu0 0
        %1770 = vmatprep.mubr.bf16.mxu0 0
        %1771 = vmatmul.mubr.bf16.gmra.mrb[0].mxu0 %v1224
        %v1772 = vpop.f32.mrb[0].mxu0
        %v1773 = vadd.f32 0.0, %v1772
        %v1774 = vpop.f32.mrb[0].mxu0
        %v1775 = vpop.f32.mrb[0].mxu0
        %v1776 = vadd.f32 0.0, %v1775
        %v1777 = vpop.f32.mrb[0].mxu0
        %1778 = vmatprep.mubr.bf16.mxu0 0
        %1779 = vmatmul.mubr.bf16.gmra.mrb[0].mxu0 %v1227
        %v1780 = vpop.f32.mrb[0].mxu0
        %v1781 = vadd.f32 0.0, %v1780
        %v1782 = vpop.f32.mrb[0].mxu0
        %v1783 = vpop.f32.mrb[0].mxu0
        %v1784 = vadd.f32 0.0, %v1783
        %v1785 = vpop.f32.mrb[0].mxu0
        %1786 = vmatprep.mubr.bf16.mxu0 0
        %1787 = vmatmul.mubr.bf16.gmra.mrb[0].mxu0 %v1230
        %v1788 = vpop.f32.mrb[0].mxu0
        %v1789 = vadd.f32 0.0, %v1788
        %v1790 = vpop.f32.mrb[0].mxu0
        %v1791 = vpop.f32.mrb[0].mxu0
        %v1792 = vadd.f32 0.0, %v1791
        %v1793 = vpop.f32.mrb[0].mxu0
        %1794 = vmatprep.mubr.bf16.mxu0 0
        %1795 = vmatmul.mubr.bf16.gmra.mrb[0].mxu0 %v1233
        %v1796 = vpop.f32.mrb[0].mxu0
        %v1797 = vadd.f32 0.0, %v1796
        %v1798 = vpop.f32.mrb[0].mxu0
        %v1799 = vpop.f32.mrb[0].mxu0
        %v1800 = vadd.f32 0.0, %v1799
        %v1801 = vpop.f32.mrb[0].mxu0
        %1802 = vmatprep.mubr.bf16.mxu0 0
        %1803 = vmatmul.mubr.bf16.gmra.mrb[0].mxu0 %v1236
        %v1804 = vpop.f32.mrb[0].mxu0
        %v1805 = vadd.f32 0.0, %v1804
        %v1806 = vpop.f32.mrb[0].mxu0
        %v1807 = vpop.f32.mrb[0].mxu0
        %v1808 = vadd.f32 0.0, %v1807
        %v1809 = vpop.f32.mrb[0].mxu0
        %1810 = vmatprep.mubr.bf16.mxu0 0
        %1811 = vmatmul.mubr.bf16.gmra.mrb[0].mxu0 %v1239
        %v1812 = vpop.f32.mrb[0].mxu0
        %v1813 = vadd.f32 0.0, %v1812
        %v1814 = vpop.f32.mrb[0].mxu0
        %v1815 = vpop.f32.mrb[0].mxu0
        %v1816 = vadd.f32 0.0, %v1815
        %v1817 = vpop.f32.mrb[0].mxu0
        %1818 = vmatprep.mubr.bf16.mxu0 0
        %1819 = vmatmul.mubr.bf16.gmra.mrb[0].mxu0 %v1242
        %v1820 = vpop.f32.mrb[0].mxu0
        %v1821 = vadd.f32 0.0, %v1820
        %v1822 = vpop.f32.mrb[0].mxu0
        %v1823 = vpop.f32.mrb[0].mxu0
        %v1824 = vadd.f32 0.0, %v1823
        %v1825 = vpop.f32.mrb[0].mxu0
        %1826 = vmatprep.mubr.bf16.mxu0 0
        %1827 = vmatmul.mubr.bf16.gmra.mrb[0].mxu0 %v1245
        %v1828 = vpop.f32.mrb[0].mxu0
        %v1829 = vadd.f32 0.0, %v1828
        %v1830 = vpop.f32.mrb[0].mxu0
        %v1831 = vpop.f32.mrb[0].mxu0
        %v1832 = vadd.f32 0.0, %v1831
        %v1833 = vpop.f32.mrb[0].mxu0
        %1834 = vmatprep.mubr.bf16.mxu0 0
        %1835 = vmatmul.mubr.bf16.gmra.mrb[0].mxu0 %v1248
        %v1836 = vpop.f32.mrb[0].mxu0
        %v1837 = vadd.f32 0.0, %v1836
        %v1838 = vpop.f32.mrb[0].mxu0
        %v1839 = vpop.f32.mrb[0].mxu0
        %v1840 = vadd.f32 0.0, %v1839
        %v1841 = vpop.f32.mrb[0].mxu0
        %1842 = vmatprep.mubr.bf16.mxu0 0
        %1843 = vmatmul.mubr.bf16.gmra.mrb[0].mxu0 %v1251
        %v1844 = vpop.f32.mrb[0].mxu0
        %v1845 = vadd.f32 0.0, %v1844
        %v1846 = vpop.f32.mrb[0].mxu0
        %v1847 = vpop.f32.mrb[0].mxu0
        %v1848 = vadd.f32 0.0, %v1847
        %v1849 = vpop.f32.mrb[0].mxu0
        %1850 = vmatprep.mubr.bf16.mxu0 0
        %1851 = vmatmul.mubr.bf16.gmra.mrb[0].mxu0 %v1254
        %v1852 = vpop.f32.mrb[0].mxu0
        %v1853 = vadd.f32 0.0, %v1852
        %v1854 = vpop.f32.mrb[0].mxu0
        %v1855 = vpop.f32.mrb[0].mxu0
        %v1856 = vadd.f32 0.0, %v1855
        %v1857 = vpop.f32.mrb[0].mxu0
        %1858 = vmatprep.mubr.bf16.mxu0 0
        %1859 = vmatmul.mubr.bf16.gmra.mrb[0].mxu0 %v1257
        %v1860 = vpop.f32.mrb[0].mxu0
        %v1861 = vadd.f32 0.0, %v1860
        %v1862 = vpop.f32.mrb[0].mxu0
        %v1863 = vpop.f32.mrb[0].mxu0
        %v1864 = vadd.f32 0.0, %v1863
        %v1865 = vpop.f32.mrb[0].mxu0
        %1866 = vmatprep.mubr.bf16.mxu0 0
        %1867 = vmatmul.mubr.bf16.gmra.mrb[0].mxu0 %v1260
        %v1868 = vpop.f32.mrb[0].mxu0
        %v1869 = vadd.f32 0.0, %v1868
        %v1870 = vpop.f32.mrb[0].mxu0
        %v1871 = vpop.f32.mrb[0].mxu0
        %v1872 = vadd.f32 0.0, %v1871
        %v1873 = vpop.f32.mrb[0].mxu0
        %1874 = vmatprep.mubr.bf16.mxu0 0
        %1875 = vmatmul.mubr.bf16.gmra.mrb[0].mxu0 %v1263
        %v1876 = vpop.f32.mrb[0].mxu0
        %v1877 = vadd.f32 0.0, %v1876
        %v1878 = vpop.f32.mrb[0].mxu0
        %v1879 = vpop.f32.mrb[0].mxu0
        %v1880 = vadd.f32 0.0, %v1879
        %v1881 = vpop.f32.mrb[0].mxu0
        %1882 = vmatprep.mubr.bf16.mxu0 0
        %1883 = vmatmul.mubr.bf16.gmra.mrb[0].mxu0 %v1266
        %v1884 = vpop.f32.mrb[0].mxu0
        %v1885 = vadd.f32 0.0, %v1884
        %v1886 = vpop.f32.mrb[0].mxu0
        %v1887 = vpop.f32.mrb[0].mxu0
        %v1888 = vadd.f32 0.0, %v1887
        %v1889 = vpop.f32.mrb[0].mxu0
        %1890 = vmatprep.mubr.bf16.mxu0 0
        %1891 = vmatmul.mubr.bf16.gmra.mrb[0].mxu0 %v1733
        %v1892 = vpop.f32.mrb[0].mxu0
        %v1893 = vadd.f32 0.0, %v1892
        %v1894 = vpop.f32.mrb[0].mxu0
        %v1895 = vpop.f32.mrb[0].mxu0
        %v1896 = vadd.f32 0.0, %v1895
        %v1897 = vpop.f32.mrb[0].mxu0
        %1898 = vdwg.mxu0
        %v1899 = vadd.f32 %v1694, %v1773
        %v1900 = vadd.f32 %v1695, %v1776
        %v1901 = vadd.f32 %v1696, %v1781
        %v1902 = vadd.f32 %v1697, %v1784
        %v1903 = vadd.f32 %v1698, %v1789
        %v1904 = vadd.f32 %v1699, %v1792
        %v1905 = vadd.f32 %v1700, %v1797
        %v1906 = vadd.f32 %v1701, %v1800
        %v1907 = vadd.f32 %v1702, %v1805
        %v1908 = vadd.f32 %v1703, %v1808
        %v1909 = vadd.f32 %v1704, %v1813
        %v1910 = vadd.f32 %v1705, %v1816
        %v1911 = vadd.f32 %v1706, %v1821
        %v1912 = vadd.f32 %v1707, %v1824
        %v1913 = vadd.f32 %v1708, %v1829
        %v1914 = vadd.f32 %v1709, %v1832
        %v1915 = vadd.f32 %v1710, %v1837
        %v1916 = vadd.f32 %v1711, %v1840
        %v1917 = vadd.f32 %v1712, %v1845
        %v1918 = vadd.f32 %v1713, %v1848
        %v1919 = vadd.f32 %v1714, %v1853
        %v1920 = vadd.f32 %v1715, %v1856
        %v1921 = vadd.f32 %v1716, %v1861
        %v1922 = vadd.f32 %v1717, %v1864
        %v1923 = vadd.f32 %v1718, %v1869
        %v1924 = vadd.f32 %v1719, %v1872
        %v1925 = vadd.f32 %v1720, %v1877
        %v1926 = vadd.f32 %v1721, %v1880
        %v1927 = vadd.f32 %v1722, %v1885
        %v1928 = vadd.f32 %v1723, %v1888
        %v1929 = vadd.f32 %v1724, %v1893
        %v1930 = vadd.f32 %v1725, %v1896
        %s1931 = scalar_lea.vmem %s1, 16
        %v1932 = vld [vmem:[%s1931] sm:$0xf]
        %v1933 = vunpack.c.l.b16 %v655
        %v1934 = vunpack.c.l.b16 %v665
        %v1935 = vpack.c.b16 %v1934, %v1933
        %v1937 = vsel %vm942, %v1935, 0
        %v1940 = vsel %vm991, %v1932, 0
        %1942 = vmatprep.subr.bf16.mxu0 0
        %1943 = vmatpush1.bf16.msra.mxu0 %v1940
        %1944 = vmatprep.subr.bf16.mxu0 0
        %1945 = vmatpush1.bf16.msra.mxu0 0
        %1946 = vmatprep.subr.bf16.mxu0 0
        %1947 = vmatpush1.bf16.msra.mxu0 0
        %1948 = vmatprep.subr.bf16.mxu0 0
        %1949 = vmatpush1.bf16.msra.mxu0 0
        %1950 = vmatprep.subr.bf16.mxu0 0
        %1951 = vmatpush1.bf16.msra.mxu0 0
        %1952 = vmatprep.subr.bf16.mxu0 0
        %1953 = vmatpush1.bf16.msra.mxu0 0
        %1954 = vmatprep.subr.bf16.mxu0 0
        %1955 = vmatpush1.bf16.msra.mxu0 0
        %1956 = vmatprep.subr.bf16.mxu0 0
        %1957 = vmatpush1.bf16.msra.mxu0 0
        %1958 = vmatprep.subr.bf16.mxu0 0
        %1959 = vmatpush1.bf16.msra.mxu0 0
        %1960 = vmatprep.subr.bf16.mxu0 0
        %1961 = vmatpush1.bf16.msra.mxu0 0
        %1962 = vmatprep.subr.bf16.mxu0 0
        %1963 = vmatpush1.bf16.msra.mxu0 0
        %1964 = vmatprep.subr.bf16.mxu0 0
        %1965 = vmatpush1.bf16.msra.mxu0 0
        %1966 = vmatprep.subr.bf16.mxu0 0
        %1967 = vmatpush1.bf16.msra.mxu0 0
        %1968 = vmatprep.subr.bf16.mxu0 0
        %1969 = vmatpush1.bf16.msra.mxu0 0
        %1970 = vmatprep.subr.bf16.mxu0 0
        %1971 = vmatpush1.bf16.msra.mxu0 0
        %1972 = vmatprep.subr.bf16.mxu0 0
        %1973 = vmatpush1.bf16.msra.mxu0 0
        %1974 = vmatprep.mubr.bf16.mxu0 0
        %1975 = vmatmul.mubr.bf16.gmra.mrb[0].mxu0 %v947
        %v1976 = vpop.f32.mrb[0].mxu0
        %v1977 = vadd.f32 0.0, %v1976
        %v1978 = vpop.f32.mrb[0].mxu0
        %v1979 = vpop.f32.mrb[0].mxu0
        %v1980 = vadd.f32 0.0, %v1979
        %v1981 = vpop.f32.mrb[0].mxu0
        %1982 = vmatprep.mubr.bf16.mxu0 0
        %1983 = vmatmul.mubr.bf16.gmra.mrb[0].mxu0 %v950
        %v1984 = vpop.f32.mrb[0].mxu0
        %v1985 = vadd.f32 0.0, %v1984
        %v1986 = vpop.f32.mrb[0].mxu0
        %v1987 = vpop.f32.mrb[0].mxu0
        %v1988 = vadd.f32 0.0, %v1987
        %v1989 = vpop.f32.mrb[0].mxu0
        %1990 = vmatprep.mubr.bf16.mxu0 0
        %1991 = vmatmul.mubr.bf16.gmra.mrb[0].mxu0 %v953
        %v1992 = vpop.f32.mrb[0].mxu0
        %v1993 = vadd.f32 0.0, %v1992
        %v1994 = vpop.f32.mrb[0].mxu0
        %v1995 = vpop.f32.mrb[0].mxu0
        %v1996 = vadd.f32 0.0, %v1995
        %v1997 = vpop.f32.mrb[0].mxu0
        %1998 = vmatprep.mubr.bf16.mxu0 0
        %1999 = vmatmul.mubr.bf16.gmra.mrb[0].mxu0 %v956
        %v2000 = vpop.f32.mrb[0].mxu0
        %v2001 = vadd.f32 0.0, %v2000
        %v2002 = vpop.f32.mrb[0].mxu0
        %v2003 = vpop.f32.mrb[0].mxu0
        %v2004 = vadd.f32 0.0, %v2003
        %v2005 = vpop.f32.mrb[0].mxu0
        %2006 = vmatprep.mubr.bf16.mxu0 0
        %2007 = vmatmul.mubr.bf16.gmra.mrb[0].mxu0 %v959
        %v2008 = vpop.f32.mrb[0].mxu0
        %v2009 = vadd.f32 0.0, %v2008
        %v2010 = vpop.f32.mrb[0].mxu0
        %v2011 = vpop.f32.mrb[0].mxu0
        %v2012 = vadd.f32 0.0, %v2011
        %v2013 = vpop.f32.mrb[0].mxu0
        %2014 = vmatprep.mubr.bf16.mxu0 0
        %2015 = vmatmul.mubr.bf16.gmra.mrb[0].mxu0 %v962
        %v2016 = vpop.f32.mrb[0].mxu0
        %v2017 = vadd.f32 0.0, %v2016
        %v2018 = vpop.f32.mrb[0].mxu0
        %v2019 = vpop.f32.mrb[0].mxu0
        %v2020 = vadd.f32 0.0, %v2019
        %v2021 = vpop.f32.mrb[0].mxu0
        %2022 = vmatprep.mubr.bf16.mxu0 0
        %2023 = vmatmul.mubr.bf16.gmra.mrb[0].mxu0 %v965
        %v2024 = vpop.f32.mrb[0].mxu0
        %v2025 = vadd.f32 0.0, %v2024
        %v2026 = vpop.f32.mrb[0].mxu0
        %v2027 = vpop.f32.mrb[0].mxu0
        %v2028 = vadd.f32 0.0, %v2027
        %v2029 = vpop.f32.mrb[0].mxu0
        %2030 = vmatprep.mubr.bf16.mxu0 0
        %2031 = vmatmul.mubr.bf16.gmra.mrb[0].mxu0 %v968
        %v2032 = vpop.f32.mrb[0].mxu0
        %v2033 = vadd.f32 0.0, %v2032
        %v2034 = vpop.f32.mrb[0].mxu0
        %v2035 = vpop.f32.mrb[0].mxu0
        %v2036 = vadd.f32 0.0, %v2035
        %v2037 = vpop.f32.mrb[0].mxu0
        %2038 = vmatprep.mubr.bf16.mxu0 0
        %2039 = vmatmul.mubr.bf16.gmra.mrb[0].mxu0 %v971
        %v2040 = vpop.f32.mrb[0].mxu0
        %v2041 = vadd.f32 0.0, %v2040
        %v2042 = vpop.f32.mrb[0].mxu0
        %v2043 = vpop.f32.mrb[0].mxu0
        %v2044 = vadd.f32 0.0, %v2043
        %v2045 = vpop.f32.mrb[0].mxu0
        %2046 = vmatprep.mubr.bf16.mxu0 0
        %2047 = vmatmul.mubr.bf16.gmra.mrb[0].mxu0 %v974
        %v2048 = vpop.f32.mrb[0].mxu0
        %v2049 = vadd.f32 0.0, %v2048
        %v2050 = vpop.f32.mrb[0].mxu0
        %v2051 = vpop.f32.mrb[0].mxu0
        %v2052 = vadd.f32 0.0, %v2051
        %v2053 = vpop.f32.mrb[0].mxu0
        %2054 = vmatprep.mubr.bf16.mxu0 0
        %2055 = vmatmul.mubr.bf16.gmra.mrb[0].mxu0 %v977
        %v2056 = vpop.f32.mrb[0].mxu0
        %v2057 = vadd.f32 0.0, %v2056
        %v2058 = vpop.f32.mrb[0].mxu0
        %v2059 = vpop.f32.mrb[0].mxu0
        %v2060 = vadd.f32 0.0, %v2059
        %v2061 = vpop.f32.mrb[0].mxu0
        %2062 = vmatprep.mubr.bf16.mxu0 0
        %2063 = vmatmul.mubr.bf16.gmra.mrb[0].mxu0 %v980
        %v2064 = vpop.f32.mrb[0].mxu0
        %v2065 = vadd.f32 0.0, %v2064
        %v2066 = vpop.f32.mrb[0].mxu0
        %v2067 = vpop.f32.mrb[0].mxu0
        %v2068 = vadd.f32 0.0, %v2067
        %v2069 = vpop.f32.mrb[0].mxu0
        %2070 = vmatprep.mubr.bf16.mxu0 0
        %2071 = vmatmul.mubr.bf16.gmra.mrb[0].mxu0 %v983
        %v2072 = vpop.f32.mrb[0].mxu0
        %v2073 = vadd.f32 0.0, %v2072
        %v2074 = vpop.f32.mrb[0].mxu0
        %v2075 = vpop.f32.mrb[0].mxu0
        %v2076 = vadd.f32 0.0, %v2075
        %v2077 = vpop.f32.mrb[0].mxu0
        %2078 = vmatprep.mubr.bf16.mxu0 0
        %2079 = vmatmul.mubr.bf16.gmra.mrb[0].mxu0 %v986
        %v2080 = vpop.f32.mrb[0].mxu0
        %v2081 = vadd.f32 0.0, %v2080
        %v2082 = vpop.f32.mrb[0].mxu0
        %v2083 = vpop.f32.mrb[0].mxu0
        %v2084 = vadd.f32 0.0, %v2083
        %v2085 = vpop.f32.mrb[0].mxu0
        %2086 = vmatprep.mubr.bf16.mxu0 0
        %2087 = vmatmul.mubr.bf16.gmra.mrb[0].mxu0 %v989
        %v2088 = vpop.f32.mrb[0].mxu0
        %v2089 = vadd.f32 0.0, %v2088
        %v2090 = vpop.f32.mrb[0].mxu0
        %v2091 = vpop.f32.mrb[0].mxu0
        %v2092 = vadd.f32 0.0, %v2091
        %v2093 = vpop.f32.mrb[0].mxu0
        %2094 = vmatprep.mubr.bf16.mxu0 0
        %2095 = vmatmul.mubr.bf16.gmra.mrb[0].mxu0 %v1937
        %v2096 = vpop.f32.mrb[0].mxu0
        %v2097 = vadd.f32 0.0, %v2096
        %v2098 = vpop.f32.mrb[0].mxu0
        %v2099 = vpop.f32.mrb[0].mxu0
        %v2100 = vadd.f32 0.0, %v2099
        %v2101 = vpop.f32.mrb[0].mxu0
        %2102 = vdwg.mxu0
        %v2103 = vadd.f32 %v1899, %v1977
        %v2104 = vadd.f32 %v1900, %v1980
        %v2105 = vadd.f32 %v1901, %v1985
        %v2106 = vadd.f32 %v1902, %v1988
        %v2107 = vadd.f32 %v1903, %v1993
        %v2108 = vadd.f32 %v1904, %v1996
        %v2109 = vadd.f32 %v1905, %v2001
        %v2110 = vadd.f32 %v1906, %v2004
        %v2111 = vadd.f32 %v1907, %v2009
        %v2112 = vadd.f32 %v1908, %v2012
        %v2113 = vadd.f32 %v1909, %v2017
        %v2114 = vadd.f32 %v1910, %v2020
        %v2115 = vadd.f32 %v1911, %v2025
        %v2116 = vadd.f32 %v1912, %v2028
        %v2117 = vadd.f32 %v1913, %v2033
        %v2118 = vadd.f32 %v1914, %v2036
        %v2119 = vadd.f32 %v1915, %v2041
        %v2120 = vadd.f32 %v1916, %v2044
        %v2121 = vadd.f32 %v1917, %v2049
        %v2122 = vadd.f32 %v1918, %v2052
        %v2123 = vadd.f32 %v1919, %v2057
        %v2124 = vadd.f32 %v1920, %v2060
        %v2125 = vadd.f32 %v1921, %v2065
        %v2126 = vadd.f32 %v1922, %v2068
        %v2127 = vadd.f32 %v1923, %v2073
        %v2128 = vadd.f32 %v1924, %v2076
        %v2129 = vadd.f32 %v1925, %v2081
        %v2130 = vadd.f32 %v1926, %v2084
        %v2131 = vadd.f32 %v1927, %v2089
        %v2132 = vadd.f32 %v1928, %v2092
        %v2133 = vadd.f32 %v1929, %v2097
        %v2134 = vadd.f32 %v1930, %v2100
        %s2135 = scalar_lea.vmem %s1, 20
        %v2136 = vld [vmem:[%s2135] sm:$0xf]
        %v2137 = vunpack.c.l.b16 %v880
        %v2138 = vunpack.c.l.b16 %v883
        %v2139 = vpack.c.b16 %v2138, %v2137
        %v2141 = vsel %vm942, %v2139, 0
        %v2144 = vsel %vm991, %v2136, 0
        %2146 = vmatprep.subr.bf16.mxu0 0
        %2147 = vmatpush1.bf16.msra.mxu0 %v2144
        %2148 = vmatprep.subr.bf16.mxu0 0
        %2149 = vmatpush1.bf16.msra.mxu0 0
        %2150 = vmatprep.subr.bf16.mxu0 0
        %2151 = vmatpush1.bf16.msra.mxu0 0
        %2152 = vmatprep.subr.bf16.mxu0 0
        %2153 = vmatpush1.bf16.msra.mxu0 0
        %2154 = vmatprep.subr.bf16.mxu0 0
        %2155 = vmatpush1.bf16.msra.mxu0 0
        %2156 = vmatprep.subr.bf16.mxu0 0
        %2157 = vmatpush1.bf16.msra.mxu0 0
        %2158 = vmatprep.subr.bf16.mxu0 0
        %2159 = vmatpush1.bf16.msra.mxu0 0
        %2160 = vmatprep.subr.bf16.mxu0 0
        %2161 = vmatpush1.bf16.msra.mxu0 0
        %2162 = vmatprep.subr.bf16.mxu0 0
        %2163 = vmatpush1.bf16.msra.mxu0 0
        %2164 = vmatprep.subr.bf16.mxu0 0
        %2165 = vmatpush1.bf16.msra.mxu0 0
        %2166 = vmatprep.subr.bf16.mxu0 0
        %2167 = vmatpush1.bf16.msra.mxu0 0
        %2168 = vmatprep.subr.bf16.mxu0 0
        %2169 = vmatpush1.bf16.msra.mxu0 0
        %2170 = vmatprep.subr.bf16.mxu0 0
        %2171 = vmatpush1.bf16.msra.mxu0 0
        %2172 = vmatprep.subr.bf16.mxu0 0
        %2173 = vmatpush1.bf16.msra.mxu0 0
        %2174 = vmatprep.subr.bf16.mxu0 0
        %2175 = vmatpush1.bf16.msra.mxu0 0
        %2176 = vmatprep.subr.bf16.mxu0 0
        %2177 = vmatpush1.bf16.msra.mxu0 0
        %2178 = vmatprep.mubr.bf16.mxu0 0
        %2179 = vmatmul.mubr.bf16.gmra.mrb[0].mxu0 %v1486
        %v2180 = vpop.f32.mrb[0].mxu0
        %v2181 = vadd.f32 0.0, %v2180
        %v2182 = vpop.f32.mrb[0].mxu0
        %v2183 = vpop.f32.mrb[0].mxu0
        %v2184 = vadd.f32 0.0, %v2183
        %v2185 = vpop.f32.mrb[0].mxu0
        %2186 = vmatprep.mubr.bf16.mxu0 0
        %2187 = vmatmul.mubr.bf16.gmra.mrb[0].mxu0 %v1489
        %v2188 = vpop.f32.mrb[0].mxu0
        %v2189 = vadd.f32 0.0, %v2188
        %v2190 = vpop.f32.mrb[0].mxu0
        %v2191 = vpop.f32.mrb[0].mxu0
        %v2192 = vadd.f32 0.0, %v2191
        %v2193 = vpop.f32.mrb[0].mxu0
        %2194 = vmatprep.mubr.bf16.mxu0 0
        %2195 = vmatmul.mubr.bf16.gmra.mrb[0].mxu0 %v1492
        %v2196 = vpop.f32.mrb[0].mxu0
        %v2197 = vadd.f32 0.0, %v2196
        %v2198 = vpop.f32.mrb[0].mxu0
        %v2199 = vpop.f32.mrb[0].mxu0
        %v2200 = vadd.f32 0.0, %v2199
        %v2201 = vpop.f32.mrb[0].mxu0
        %2202 = vmatprep.mubr.bf16.mxu0 0
        %2203 = vmatmul.mubr.bf16.gmra.mrb[0].mxu0 %v1495
        %v2204 = vpop.f32.mrb[0].mxu0
        %v2205 = vadd.f32 0.0, %v2204
        %v2206 = vpop.f32.mrb[0].mxu0
        %v2207 = vpop.f32.mrb[0].mxu0
        %v2208 = vadd.f32 0.0, %v2207
        %v2209 = vpop.f32.mrb[0].mxu0
        %2210 = vmatprep.mubr.bf16.mxu0 0
        %2211 = vmatmul.mubr.bf16.gmra.mrb[0].mxu0 %v1498
        %v2212 = vpop.f32.mrb[0].mxu0
        %v2213 = vadd.f32 0.0, %v2212
        %v2214 = vpop.f32.mrb[0].mxu0
        %v2215 = vpop.f32.mrb[0].mxu0
        %v2216 = vadd.f32 0.0, %v2215
        %v2217 = vpop.f32.mrb[0].mxu0
        %2218 = vmatprep.mubr.bf16.mxu0 0
        %2219 = vmatmul.mubr.bf16.gmra.mrb[0].mxu0 %v1501
        %v2220 = vpop.f32.mrb[0].mxu0
        %v2221 = vadd.f32 0.0, %v2220
        %v2222 = vpop.f32.mrb[0].mxu0
        %v2223 = vpop.f32.mrb[0].mxu0
        %v2224 = vadd.f32 0.0, %v2223
        %v2225 = vpop.f32.mrb[0].mxu0
        %2226 = vmatprep.mubr.bf16.mxu0 0
        %2227 = vmatmul.mubr.bf16.gmra.mrb[0].mxu0 %v1504
        %v2228 = vpop.f32.mrb[0].mxu0
        %v2229 = vadd.f32 0.0, %v2228
        %v2230 = vpop.f32.mrb[0].mxu0
        %v2231 = vpop.f32.mrb[0].mxu0
        %v2232 = vadd.f32 0.0, %v2231
        %v2233 = vpop.f32.mrb[0].mxu0
        %2234 = vmatprep.mubr.bf16.mxu0 0
        %2235 = vmatmul.mubr.bf16.gmra.mrb[0].mxu0 %v1507
        %v2236 = vpop.f32.mrb[0].mxu0
        %v2237 = vadd.f32 0.0, %v2236
        %v2238 = vpop.f32.mrb[0].mxu0
        %v2239 = vpop.f32.mrb[0].mxu0
        %v2240 = vadd.f32 0.0, %v2239
        %v2241 = vpop.f32.mrb[0].mxu0
        %2242 = vmatprep.mubr.bf16.mxu0 0
        %2243 = vmatmul.mubr.bf16.gmra.mrb[0].mxu0 %v1510
        %v2244 = vpop.f32.mrb[0].mxu0
        %v2245 = vadd.f32 0.0, %v2244
        %v2246 = vpop.f32.mrb[0].mxu0
        %v2247 = vpop.f32.mrb[0].mxu0
        %v2248 = vadd.f32 0.0, %v2247
        %v2249 = vpop.f32.mrb[0].mxu0
        %2250 = vmatprep.mubr.bf16.mxu0 0
        %2251 = vmatmul.mubr.bf16.gmra.mrb[0].mxu0 %v1513
        %v2252 = vpop.f32.mrb[0].mxu0
        %v2253 = vadd.f32 0.0, %v2252
        %v2254 = vpop.f32.mrb[0].mxu0
        %v2255 = vpop.f32.mrb[0].mxu0
        %v2256 = vadd.f32 0.0, %v2255
        %v2257 = vpop.f32.mrb[0].mxu0
        %2258 = vmatprep.mubr.bf16.mxu0 0
        %2259 = vmatmul.mubr.bf16.gmra.mrb[0].mxu0 %v1516
        %v2260 = vpop.f32.mrb[0].mxu0
        %v2261 = vadd.f32 0.0, %v2260
        %v2262 = vpop.f32.mrb[0].mxu0
        %v2263 = vpop.f32.mrb[0].mxu0
        %v2264 = vadd.f32 0.0, %v2263
        %v2265 = vpop.f32.mrb[0].mxu0
        %2266 = vmatprep.mubr.bf16.mxu0 0
        %2267 = vmatmul.mubr.bf16.gmra.mrb[0].mxu0 %v1519
        %v2268 = vpop.f32.mrb[0].mxu0
        %v2269 = vadd.f32 0.0, %v2268
        %v2270 = vpop.f32.mrb[0].mxu0
        %v2271 = vpop.f32.mrb[0].mxu0
        %v2272 = vadd.f32 0.0, %v2271
        %v2273 = vpop.f32.mrb[0].mxu0
        %2274 = vmatprep.mubr.bf16.mxu0 0
        %2275 = vmatmul.mubr.bf16.gmra.mrb[0].mxu0 %v1522
        %v2276 = vpop.f32.mrb[0].mxu0
        %v2277 = vadd.f32 0.0, %v2276
        %v2278 = vpop.f32.mrb[0].mxu0
        %v2279 = vpop.f32.mrb[0].mxu0
        %v2280 = vadd.f32 0.0, %v2279
        %v2281 = vpop.f32.mrb[0].mxu0
        %2282 = vmatprep.mubr.bf16.mxu0 0
        %2283 = vmatmul.mubr.bf16.gmra.mrb[0].mxu0 %v1525
        %v2284 = vpop.f32.mrb[0].mxu0
        %v2285 = vadd.f32 0.0, %v2284
        %v2286 = vpop.f32.mrb[0].mxu0
        %v2287 = vpop.f32.mrb[0].mxu0
        %v2288 = vadd.f32 0.0, %v2287
        %v2289 = vpop.f32.mrb[0].mxu0
        %2290 = vmatprep.mubr.bf16.mxu0 0
        %2291 = vmatmul.mubr.bf16.gmra.mrb[0].mxu0 %v1528
        %v2292 = vpop.f32.mrb[0].mxu0
        %v2293 = vadd.f32 0.0, %v2292
        %v2294 = vpop.f32.mrb[0].mxu0
        %v2295 = vpop.f32.mrb[0].mxu0
        %v2296 = vadd.f32 0.0, %v2295
        %v2297 = vpop.f32.mrb[0].mxu0
        %2298 = vmatprep.mubr.bf16.mxu0 0
        %2299 = vmatmul.mubr.bf16.gmra.mrb[0].mxu0 %v2141
        %v2300 = vpop.f32.mrb[0].mxu0
        %v2301 = vadd.f32 0.0, %v2300
        %v2302 = vpop.f32.mrb[0].mxu0
        %v2303 = vpop.f32.mrb[0].mxu0
        %v2304 = vadd.f32 0.0, %v2303
        %v2305 = vpop.f32.mrb[0].mxu0
        %2306 = vdwg.mxu0
        %v2307 = vadd.f32 %v2103, %v2181
        %v2308 = vadd.f32 %v2104, %v2184
        %v2309 = vadd.f32 %v2105, %v2189
        %v2310 = vadd.f32 %v2106, %v2192
        %v2311 = vadd.f32 %v2107, %v2197
        %v2312 = vadd.f32 %v2108, %v2200
        %v2313 = vadd.f32 %v2109, %v2205
        %v2314 = vadd.f32 %v2110, %v2208
        %v2315 = vadd.f32 %v2111, %v2213
        %v2316 = vadd.f32 %v2112, %v2216
        %v2317 = vadd.f32 %v2113, %v2221
        %v2318 = vadd.f32 %v2114, %v2224
        %v2319 = vadd.f32 %v2115, %v2229
        %v2320 = vadd.f32 %v2116, %v2232
        %v2321 = vadd.f32 %v2117, %v2237
        %v2322 = vadd.f32 %v2118, %v2240
        %v2323 = vadd.f32 %v2119, %v2245
        %v2324 = vadd.f32 %v2120, %v2248
        %v2325 = vadd.f32 %v2121, %v2253
        %v2326 = vadd.f32 %v2122, %v2256
        %v2327 = vadd.f32 %v2123, %v2261
        %v2328 = vadd.f32 %v2124, %v2264
        %v2329 = vadd.f32 %v2125, %v2269
        %v2330 = vadd.f32 %v2126, %v2272
        %v2331 = vadd.f32 %v2127, %v2277
        %v2332 = vadd.f32 %v2128, %v2280
        %v2333 = vadd.f32 %v2129, %v2285
        %v2334 = vadd.f32 %v2130, %v2288
        %v2335 = vadd.f32 %v2131, %v2293
        %v2336 = vadd.f32 %v2132, %v2296
        %v2337 = vadd.f32 %v2133, %v2301
        %v2338 = vadd.f32 %v2134, %v2304
        %s2339 = scalar_lea.vmem %s1, 24
        %v2340 = vld [vmem:[%s2339] sm:$0xf]
        %v2342 = vunpack.c.l.b16 %v235
        %v2343 = vunpack.c.l.b16 %v236
        %v2344 = vpack.c.b16 %v2343, %v2342
        %v2346 = vsel %vm942, %v2344, 0
        %v2349 = vsel %vm991, %v2340, 0
        %2351 = vmatprep.subr.bf16.mxu0 0
        %2352 = vmatpush1.bf16.msra.mxu0 %v2349
        %2353 = vmatprep.subr.bf16.mxu0 0
        %2354 = vmatpush1.bf16.msra.mxu0 0
        %2355 = vmatprep.subr.bf16.mxu0 0
        %2356 = vmatpush1.bf16.msra.mxu0 0
        %2357 = vmatprep.subr.bf16.mxu0 0
        %2358 = vmatpush1.bf16.msra.mxu0 0
        %2359 = vmatprep.subr.bf16.mxu0 0
        %2360 = vmatpush1.bf16.msra.mxu0 0
        %2361 = vmatprep.subr.bf16.mxu0 0
        %2362 = vmatpush1.bf16.msra.mxu0 0
        %2363 = vmatprep.subr.bf16.mxu0 0
        %2364 = vmatpush1.bf16.msra.mxu0 0
        %2365 = vmatprep.subr.bf16.mxu0 0
        %2366 = vmatpush1.bf16.msra.mxu0 0
        %2367 = vmatprep.subr.bf16.mxu0 0
        %2368 = vmatpush1.bf16.msra.mxu0 0
        %2369 = vmatprep.subr.bf16.mxu0 0
        %2370 = vmatpush1.bf16.msra.mxu0 0
        %2371 = vmatprep.subr.bf16.mxu0 0
        %2372 = vmatpush1.bf16.msra.mxu0 0
        %2373 = vmatprep.subr.bf16.mxu0 0
        %2374 = vmatpush1.bf16.msra.mxu0 0
        %2375 = vmatprep.subr.bf16.mxu0 0
        %2376 = vmatpush1.bf16.msra.mxu0 0
        %2377 = vmatprep.subr.bf16.mxu0 0
        %2378 = vmatpush1.bf16.msra.mxu0 0
        %2379 = vmatprep.subr.bf16.mxu0 0
        %2380 = vmatpush1.bf16.msra.mxu0 0
        %2381 = vmatprep.subr.bf16.mxu0 0
        %2382 = vmatpush1.bf16.msra.mxu0 0
        %2383 = vmatprep.mubr.bf16.mxu0 0
        %2384 = vmatmul.mubr.bf16.gmra.mrb[0].mxu0 %v1227
        %v2385 = vpop.f32.mrb[0].mxu0
        %v2386 = vadd.f32 0.0, %v2385
        %v2387 = vpop.f32.mrb[0].mxu0
        %v2388 = vpop.f32.mrb[0].mxu0
        %v2389 = vadd.f32 0.0, %v2388
        %v2390 = vpop.f32.mrb[0].mxu0
        %2391 = vmatprep.mubr.bf16.mxu0 0
        %2392 = vmatmul.mubr.bf16.gmra.mrb[0].mxu0 %v1230
        %v2393 = vpop.f32.mrb[0].mxu0
        %v2394 = vadd.f32 0.0, %v2393
        %v2395 = vpop.f32.mrb[0].mxu0
        %v2396 = vpop.f32.mrb[0].mxu0
        %v2397 = vadd.f32 0.0, %v2396
        %v2398 = vpop.f32.mrb[0].mxu0
        %2399 = vmatprep.mubr.bf16.mxu0 0
        %2400 = vmatmul.mubr.bf16.gmra.mrb[0].mxu0 %v1233
        %v2401 = vpop.f32.mrb[0].mxu0
        %v2402 = vadd.f32 0.0, %v2401
        %v2403 = vpop.f32.mrb[0].mxu0
        %v2404 = vpop.f32.mrb[0].mxu0
        %v2405 = vadd.f32 0.0, %v2404
        %v2406 = vpop.f32.mrb[0].mxu0
        %2407 = vmatprep.mubr.bf16.mxu0 0
        %2408 = vmatmul.mubr.bf16.gmra.mrb[0].mxu0 %v1236
        %v2409 = vpop.f32.mrb[0].mxu0
        %v2410 = vadd.f32 0.0, %v2409
        %v2411 = vpop.f32.mrb[0].mxu0
        %v2412 = vpop.f32.mrb[0].mxu0
        %v2413 = vadd.f32 0.0, %v2412
        %v2414 = vpop.f32.mrb[0].mxu0
        %2415 = vmatprep.mubr.bf16.mxu0 0
        %2416 = vmatmul.mubr.bf16.gmra.mrb[0].mxu0 %v1239
        %v2417 = vpop.f32.mrb[0].mxu0
        %v2418 = vadd.f32 0.0, %v2417
        %v2419 = vpop.f32.mrb[0].mxu0
        %v2420 = vpop.f32.mrb[0].mxu0
        %v2421 = vadd.f32 0.0, %v2420
        %v2422 = vpop.f32.mrb[0].mxu0
        %2423 = vmatprep.mubr.bf16.mxu0 0
        %2424 = vmatmul.mubr.bf16.gmra.mrb[0].mxu0 %v1242
        %v2425 = vpop.f32.mrb[0].mxu0
        %v2426 = vadd.f32 0.0, %v2425
        %v2427 = vpop.f32.mrb[0].mxu0
        %v2428 = vpop.f32.mrb[0].mxu0
        %v2429 = vadd.f32 0.0, %v2428
        %v2430 = vpop.f32.mrb[0].mxu0
        %2431 = vmatprep.mubr.bf16.mxu0 0
        %2432 = vmatmul.mubr.bf16.gmra.mrb[0].mxu0 %v1245
        %v2433 = vpop.f32.mrb[0].mxu0
        %v2434 = vadd.f32 0.0, %v2433
        %v2435 = vpop.f32.mrb[0].mxu0
        %v2436 = vpop.f32.mrb[0].mxu0
        %v2437 = vadd.f32 0.0, %v2436
        %v2438 = vpop.f32.mrb[0].mxu0
        %2439 = vmatprep.mubr.bf16.mxu0 0
        %2440 = vmatmul.mubr.bf16.gmra.mrb[0].mxu0 %v1248
        %v2441 = vpop.f32.mrb[0].mxu0
        %v2442 = vadd.f32 0.0, %v2441
        %v2443 = vpop.f32.mrb[0].mxu0
        %v2444 = vpop.f32.mrb[0].mxu0
        %v2445 = vadd.f32 0.0, %v2444
        %v2446 = vpop.f32.mrb[0].mxu0
        %2447 = vmatprep.mubr.bf16.mxu0 0
        %2448 = vmatmul.mubr.bf16.gmra.mrb[0].mxu0 %v1251
        %v2449 = vpop.f32.mrb[0].mxu0
        %v2450 = vadd.f32 0.0, %v2449
        %v2451 = vpop.f32.mrb[0].mxu0
        %v2452 = vpop.f32.mrb[0].mxu0
        %v2453 = vadd.f32 0.0, %v2452
        %v2454 = vpop.f32.mrb[0].mxu0
        %2455 = vmatprep.mubr.bf16.mxu0 0
        %2456 = vmatmul.mubr.bf16.gmra.mrb[0].mxu0 %v1254
        %v2457 = vpop.f32.mrb[0].mxu0
        %v2458 = vadd.f32 0.0, %v2457
        %v2459 = vpop.f32.mrb[0].mxu0
        %v2460 = vpop.f32.mrb[0].mxu0
        %v2461 = vadd.f32 0.0, %v2460
        %v2462 = vpop.f32.mrb[0].mxu0
        %2463 = vmatprep.mubr.bf16.mxu0 0
        %2464 = vmatmul.mubr.bf16.gmra.mrb[0].mxu0 %v1257
        %v2465 = vpop.f32.mrb[0].mxu0
        %v2466 = vadd.f32 0.0, %v2465
        %v2467 = vpop.f32.mrb[0].mxu0
        %v2468 = vpop.f32.mrb[0].mxu0
        %v2469 = vadd.f32 0.0, %v2468
        %v2470 = vpop.f32.mrb[0].mxu0
        %2471 = vmatprep.mubr.bf16.mxu0 0
        %2472 = vmatmul.mubr.bf16.gmra.mrb[0].mxu0 %v1260
        %v2473 = vpop.f32.mrb[0].mxu0
        %v2474 = vadd.f32 0.0, %v2473
        %v2475 = vpop.f32.mrb[0].mxu0
        %v2476 = vpop.f32.mrb[0].mxu0
        %v2477 = vadd.f32 0.0, %v2476
        %v2478 = vpop.f32.mrb[0].mxu0
        %2479 = vmatprep.mubr.bf16.mxu0 0
        %2480 = vmatmul.mubr.bf16.gmra.mrb[0].mxu0 %v1263
        %v2481 = vpop.f32.mrb[0].mxu0
        %v2482 = vadd.f32 0.0, %v2481
        %v2483 = vpop.f32.mrb[0].mxu0
        %v2484 = vpop.f32.mrb[0].mxu0
        %v2485 = vadd.f32 0.0, %v2484
        %v2486 = vpop.f32.mrb[0].mxu0
        %2487 = vmatprep.mubr.bf16.mxu0 0
        %2488 = vmatmul.mubr.bf16.gmra.mrb[0].mxu0 %v1266
        %v2489 = vpop.f32.mrb[0].mxu0
        %v2490 = vadd.f32 0.0, %v2489
        %v2491 = vpop.f32.mrb[0].mxu0
        %v2492 = vpop.f32.mrb[0].mxu0
        %v2493 = vadd.f32 0.0, %v2492
        %v2494 = vpop.f32.mrb[0].mxu0
        %2495 = vmatprep.mubr.bf16.mxu0 0
        %2496 = vmatmul.mubr.bf16.gmra.mrb[0].mxu0 %v1733
        %v2497 = vpop.f32.mrb[0].mxu0
        %v2498 = vadd.f32 0.0, %v2497
        %v2499 = vpop.f32.mrb[0].mxu0
        %v2500 = vpop.f32.mrb[0].mxu0
        %v2501 = vadd.f32 0.0, %v2500
        %v2502 = vpop.f32.mrb[0].mxu0
        %2503 = vmatprep.mubr.bf16.mxu0 0
        %2504 = vmatmul.mubr.bf16.gmra.mrb[0].mxu0 %v2346
        %v2505 = vpop.f32.mrb[0].mxu0
        %v2506 = vadd.f32 0.0, %v2505
        %v2507 = vpop.f32.mrb[0].mxu0
        %v2508 = vpop.f32.mrb[0].mxu0
        %v2509 = vadd.f32 0.0, %v2508
        %v2510 = vpop.f32.mrb[0].mxu0
        %2511 = vdwg.mxu0
        %v2512 = vadd.f32 %v2307, %v2386
        %v2513 = vadd.f32 %v2308, %v2389
        %v2514 = vadd.f32 %v2309, %v2394
        %v2515 = vadd.f32 %v2310, %v2397
        %v2516 = vadd.f32 %v2311, %v2402
        %v2517 = vadd.f32 %v2312, %v2405
        %v2518 = vadd.f32 %v2313, %v2410
        %v2519 = vadd.f32 %v2314, %v2413
        %v2520 = vadd.f32 %v2315, %v2418
        %v2521 = vadd.f32 %v2316, %v2421
        %v2522 = vadd.f32 %v2317, %v2426
        %v2523 = vadd.f32 %v2318, %v2429
        %v2524 = vadd.f32 %v2319, %v2434
        %v2525 = vadd.f32 %v2320, %v2437
        %v2526 = vadd.f32 %v2321, %v2442
        %v2527 = vadd.f32 %v2322, %v2445
        %v2528 = vadd.f32 %v2323, %v2450
        %v2529 = vadd.f32 %v2324, %v2453
        %v2530 = vadd.f32 %v2325, %v2458
        %v2531 = vadd.f32 %v2326, %v2461
        %v2532 = vadd.f32 %v2327, %v2466
        %v2533 = vadd.f32 %v2328, %v2469
        %v2534 = vadd.f32 %v2329, %v2474
        %v2535 = vadd.f32 %v2330, %v2477
        %v2536 = vadd.f32 %v2331, %v2482
        %v2537 = vadd.f32 %v2332, %v2485
        %v2538 = vadd.f32 %v2333, %v2490
        %v2539 = vadd.f32 %v2334, %v2493
        %v2540 = vadd.f32 %v2335, %v2498
        %v2541 = vadd.f32 %v2336, %v2501
        %v2542 = vadd.f32 %v2337, %v2506
        %v2543 = vadd.f32 %v2338, %v2509
        %s2544 = scalar_lea.vmem %s1, 28
        %v2545 = vld [vmem:[%s2544] sm:$0xf]
        %v2546 = vunpack.c.l.b16 %v679
        %v2547 = vunpack.c.l.b16 %v689
        %v2548 = vpack.c.b16 %v2547, %v2546
        %v2550 = vsel %vm942, %v2548, 0
        %v2553 = vsel %vm991, %v2545, 0
        %2555 = vmatprep.subr.bf16.mxu0 0
        %2556 = vmatpush1.bf16.msra.mxu0 %v2553
        %2557 = vmatprep.subr.bf16.mxu0 0
        %2558 = vmatpush1.bf16.msra.mxu0 0
        %2559 = vmatprep.subr.bf16.mxu0 0
        %2560 = vmatpush1.bf16.msra.mxu0 0
        %2561 = vmatprep.subr.bf16.mxu0 0
        %2562 = vmatpush1.bf16.msra.mxu0 0
        %2563 = vmatprep.subr.bf16.mxu0 0
        %2564 = vmatpush1.bf16.msra.mxu0 0
        %2565 = vmatprep.subr.bf16.mxu0 0
        %2566 = vmatpush1.bf16.msra.mxu0 0
        %2567 = vmatprep.subr.bf16.mxu0 0
        %2568 = vmatpush1.bf16.msra.mxu0 0
        %2569 = vmatprep.subr.bf16.mxu0 0
        %2570 = vmatpush1.bf16.msra.mxu0 0
        %2571 = vmatprep.subr.bf16.mxu0 0
        %2572 = vmatpush1.bf16.msra.mxu0 0
        %2573 = vmatprep.subr.bf16.mxu0 0
        %2574 = vmatpush1.bf16.msra.mxu0 0
        %2575 = vmatprep.subr.bf16.mxu0 0
        %2576 = vmatpush1.bf16.msra.mxu0 0
        %2577 = vmatprep.subr.bf16.mxu0 0
        %2578 = vmatpush1.bf16.msra.mxu0 0
        %2579 = vmatprep.subr.bf16.mxu0 0
        %2580 = vmatpush1.bf16.msra.mxu0 0
        %2581 = vmatprep.subr.bf16.mxu0 0
        %2582 = vmatpush1.bf16.msra.mxu0 0
        %2583 = vmatprep.subr.bf16.mxu0 0
        %2584 = vmatpush1.bf16.msra.mxu0 0
        %2585 = vmatprep.subr.bf16.mxu0 0
        %2586 = vmatpush1.bf16.msra.mxu0 0
        %2587 = vmatprep.mubr.bf16.mxu0 0
        %2588 = vmatmul.mubr.bf16.gmra.mrb[0].mxu0 %v950
        %v2589 = vpop.f32.mrb[0].mxu0
        %v2590 = vadd.f32 0.0, %v2589
        %v2591 = vpop.f32.mrb[0].mxu0
        %v2592 = vpop.f32.mrb[0].mxu0
        %v2593 = vadd.f32 0.0, %v2592
        %v2594 = vpop.f32.mrb[0].mxu0
        %2595 = vmatprep.mubr.bf16.mxu0 0
        %2596 = vmatmul.mubr.bf16.gmra.mrb[0].mxu0 %v953
        %v2597 = vpop.f32.mrb[0].mxu0
        %v2598 = vadd.f32 0.0, %v2597
        %v2599 = vpop.f32.mrb[0].mxu0
        %v2600 = vpop.f32.mrb[0].mxu0
        %v2601 = vadd.f32 0.0, %v2600
        %v2602 = vpop.f32.mrb[0].mxu0
        %2603 = vmatprep.mubr.bf16.mxu0 0
        %2604 = vmatmul.mubr.bf16.gmra.mrb[0].mxu0 %v956
        %v2605 = vpop.f32.mrb[0].mxu0
        %v2606 = vadd.f32 0.0, %v2605
        %v2607 = vpop.f32.mrb[0].mxu0
        %v2608 = vpop.f32.mrb[0].mxu0
        %v2609 = vadd.f32 0.0, %v2608
        %v2610 = vpop.f32.mrb[0].mxu0
        %2611 = vmatprep.mubr.bf16.mxu0 0
        %2612 = vmatmul.mubr.bf16.gmra.mrb[0].mxu0 %v959
        %v2613 = vpop.f32.mrb[0].mxu0
        %v2614 = vadd.f32 0.0, %v2613
        %v2615 = vpop.f32.mrb[0].mxu0
        %v2616 = vpop.f32.mrb[0].mxu0
        %v2617 = vadd.f32 0.0, %v2616
        %v2618 = vpop.f32.mrb[0].mxu0
        %2619 = vmatprep.mubr.bf16.mxu0 0
        %2620 = vmatmul.mubr.bf16.gmra.mrb[0].mxu0 %v962
        %v2621 = vpop.f32.mrb[0].mxu0
        %v2622 = vadd.f32 0.0, %v2621
        %v2623 = vpop.f32.mrb[0].mxu0
        %v2624 = vpop.f32.mrb[0].mxu0
        %v2625 = vadd.f32 0.0, %v2624
        %v2626 = vpop.f32.mrb[0].mxu0
        %2627 = vmatprep.mubr.bf16.mxu0 0
        %2628 = vmatmul.mubr.bf16.gmra.mrb[0].mxu0 %v965
        %v2629 = vpop.f32.mrb[0].mxu0
        %v2630 = vadd.f32 0.0, %v2629
        %v2631 = vpop.f32.mrb[0].mxu0
        %v2632 = vpop.f32.mrb[0].mxu0
        %v2633 = vadd.f32 0.0, %v2632
        %v2634 = vpop.f32.mrb[0].mxu0
        %2635 = vmatprep.mubr.bf16.mxu0 0
        %2636 = vmatmul.mubr.bf16.gmra.mrb[0].mxu0 %v968
        %v2637 = vpop.f32.mrb[0].mxu0
        %v2638 = vadd.f32 0.0, %v2637
        %v2639 = vpop.f32.mrb[0].mxu0
        %v2640 = vpop.f32.mrb[0].mxu0
        %v2641 = vadd.f32 0.0, %v2640
        %v2642 = vpop.f32.mrb[0].mxu0
        %2643 = vmatprep.mubr.bf16.mxu0 0
        %2644 = vmatmul.mubr.bf16.gmra.mrb[0].mxu0 %v971
        %v2645 = vpop.f32.mrb[0].mxu0
        %v2646 = vadd.f32 0.0, %v2645
        %v2647 = vpop.f32.mrb[0].mxu0
        %v2648 = vpop.f32.mrb[0].mxu0
        %v2649 = vadd.f32 0.0, %v2648
        %v2650 = vpop.f32.mrb[0].mxu0
        %2651 = vmatprep.mubr.bf16.mxu0 0
        %2652 = vmatmul.mubr.bf16.gmra.mrb[0].mxu0 %v974
        %v2653 = vpop.f32.mrb[0].mxu0
        %v2654 = vadd.f32 0.0, %v2653
        %v2655 = vpop.f32.mrb[0].mxu0
        %v2656 = vpop.f32.mrb[0].mxu0
        %v2657 = vadd.f32 0.0, %v2656
        %v2658 = vpop.f32.mrb[0].mxu0
        %2659 = vmatprep.mubr.bf16.mxu0 0
        %2660 = vmatmul.mubr.bf16.gmra.mrb[0].mxu0 %v977
        %v2661 = vpop.f32.mrb[0].mxu0
        %v2662 = vadd.f32 0.0, %v2661
        %v2663 = vpop.f32.mrb[0].mxu0
        %v2664 = vpop.f32.mrb[0].mxu0
        %v2665 = vadd.f32 0.0, %v2664
        %v2666 = vpop.f32.mrb[0].mxu0
        %2667 = vmatprep.mubr.bf16.mxu0 0
        %2668 = vmatmul.mubr.bf16.gmra.mrb[0].mxu0 %v980
        %v2669 = vpop.f32.mrb[0].mxu0
        %v2670 = vadd.f32 0.0, %v2669
        %v2671 = vpop.f32.mrb[0].mxu0
        %v2672 = vpop.f32.mrb[0].mxu0
        %v2673 = vadd.f32 0.0, %v2672
        %v2674 = vpop.f32.mrb[0].mxu0
        %2675 = vmatprep.mubr.bf16.mxu0 0
        %2676 = vmatmul.mubr.bf16.gmra.mrb[0].mxu0 %v983
        %v2677 = vpop.f32.mrb[0].mxu0
        %v2678 = vadd.f32 0.0, %v2677
        %v2679 = vpop.f32.mrb[0].mxu0
        %v2680 = vpop.f32.mrb[0].mxu0
        %v2681 = vadd.f32 0.0, %v2680
        %v2682 = vpop.f32.mrb[0].mxu0
        %2683 = vmatprep.mubr.bf16.mxu0 0
        %2684 = vmatmul.mubr.bf16.gmra.mrb[0].mxu0 %v986
        %v2685 = vpop.f32.mrb[0].mxu0
        %v2686 = vadd.f32 0.0, %v2685
        %v2687 = vpop.f32.mrb[0].mxu0
        %v2688 = vpop.f32.mrb[0].mxu0
        %v2689 = vadd.f32 0.0, %v2688
        %v2690 = vpop.f32.mrb[0].mxu0
        %2691 = vmatprep.mubr.bf16.mxu0 0
        %2692 = vmatmul.mubr.bf16.gmra.mrb[0].mxu0 %v989
        %v2693 = vpop.f32.mrb[0].mxu0
        %v2694 = vadd.f32 0.0, %v2693
        %v2695 = vpop.f32.mrb[0].mxu0
        %v2696 = vpop.f32.mrb[0].mxu0
        %v2697 = vadd.f32 0.0, %v2696
        %v2698 = vpop.f32.mrb[0].mxu0
        %2699 = vmatprep.mubr.bf16.mxu0 0
        %2700 = vmatmul.mubr.bf16.gmra.mrb[0].mxu0 %v1937
        %v2701 = vpop.f32.mrb[0].mxu0
        %v2702 = vadd.f32 0.0, %v2701
        %v2703 = vpop.f32.mrb[0].mxu0
        %v2704 = vpop.f32.mrb[0].mxu0
        %v2705 = vadd.f32 0.0, %v2704
        %v2706 = vpop.f32.mrb[0].mxu0
        %2707 = vmatprep.mubr.bf16.mxu0 0
        %2708 = vmatmul.mubr.bf16.gmra.mrb[0].mxu0 %v2550
        %v2709 = vpop.f32.mrb[0].mxu0
        %v2710 = vadd.f32 0.0, %v2709
        %v2711 = vpop.f32.mrb[0].mxu0
        %v2712 = vpop.f32.mrb[0].mxu0
        %v2713 = vadd.f32 0.0, %v2712
        %v2714 = vpop.f32.mrb[0].mxu0
        %2715 = vdwg.mxu0
        %v2716 = vadd.f32 %v2512, %v2590
        %v2717 = vadd.f32 %v2513, %v2593
        %v2718 = vadd.f32 %v2514, %v2598
        %v2719 = vadd.f32 %v2515, %v2601
        %v2720 = vadd.f32 %v2516, %v2606
        %v2721 = vadd.f32 %v2517, %v2609
        %v2722 = vadd.f32 %v2518, %v2614
        %v2723 = vadd.f32 %v2519, %v2617
        %v2724 = vadd.f32 %v2520, %v2622
        %v2725 = vadd.f32 %v2521, %v2625
        %v2726 = vadd.f32 %v2522, %v2630
        %v2727 = vadd.f32 %v2523, %v2633
        %v2728 = vadd.f32 %v2524, %v2638
        %v2729 = vadd.f32 %v2525, %v2641
        %v2730 = vadd.f32 %v2526, %v2646
        %v2731 = vadd.f32 %v2527, %v2649
        %v2732 = vadd.f32 %v2528, %v2654
        %v2733 = vadd.f32 %v2529, %v2657
        %v2734 = vadd.f32 %v2530, %v2662
        %v2735 = vadd.f32 %v2531, %v2665
        %v2736 = vadd.f32 %v2532, %v2670
        %v2737 = vadd.f32 %v2533, %v2673
        %v2738 = vadd.f32 %v2534, %v2678
        %v2739 = vadd.f32 %v2535, %v2681
        %v2740 = vadd.f32 %v2536, %v2686
        %v2741 = vadd.f32 %v2537, %v2689
        %v2742 = vadd.f32 %v2538, %v2694
        %v2743 = vadd.f32 %v2539, %v2697
        %v2744 = vadd.f32 %v2540, %v2702
        %v2745 = vadd.f32 %v2541, %v2705
        %v2746 = vadd.f32 %v2542, %v2710
        %v2747 = vadd.f32 %v2543, %v2713
        %s2748 = scalar_lea.vmem %s1, 32
        %v2749 = vld [vmem:[%s2748] sm:$0xf]
        %v2750 = vunpack.c.l.b16 %v887
        %v2751 = vunpack.c.l.b16 %v890
        %v2752 = vpack.c.b16 %v2751, %v2750
        %v2754 = vsel %vm942, %v2752, 0
        %v2757 = vsel %vm991, %v2749, 0
        %2759 = vmatprep.subr.bf16.mxu0 0
        %2760 = vmatpush1.bf16.msra.mxu0 %v2757
        %2761 = vmatprep.subr.bf16.mxu0 0
        %2762 = vmatpush1.bf16.msra.mxu0 0
        %2763 = vmatprep.subr.bf16.mxu0 0
        %2764 = vmatpush1.bf16.msra.mxu0 0
        %2765 = vmatprep.subr.bf16.mxu0 0
        %2766 = vmatpush1.bf16.msra.mxu0 0
        %2767 = vmatprep.subr.bf16.mxu0 0
        %2768 = vmatpush1.bf16.msra.mxu0 0
        %2769 = vmatprep.subr.bf16.mxu0 0
        %2770 = vmatpush1.bf16.msra.mxu0 0
        %2771 = vmatprep.subr.bf16.mxu0 0
        %2772 = vmatpush1.bf16.msra.mxu0 0
        %2773 = vmatprep.subr.bf16.mxu0 0
        %2774 = vmatpush1.bf16.msra.mxu0 0
        %2775 = vmatprep.subr.bf16.mxu0 0
        %2776 = vmatpush1.bf16.msra.mxu0 0
        %2777 = vmatprep.subr.bf16.mxu0 0
        %2778 = vmatpush1.bf16.msra.mxu0 0
        %2779 = vmatprep.subr.bf16.mxu0 0
        %2780 = vmatpush1.bf16.msra.mxu0 0
        %2781 = vmatprep.subr.bf16.mxu0 0
        %2782 = vmatpush1.bf16.msra.mxu0 0
        %2783 = vmatprep.subr.bf16.mxu0 0
        %2784 = vmatpush1.bf16.msra.mxu0 0
        %2785 = vmatprep.subr.bf16.mxu0 0
        %2786 = vmatpush1.bf16.msra.mxu0 0
        %2787 = vmatprep.subr.bf16.mxu0 0
        %2788 = vmatpush1.bf16.msra.mxu0 0
        %2789 = vmatprep.subr.bf16.mxu0 0
        %2790 = vmatpush1.bf16.msra.mxu0 0
        %2791 = vmatprep.mubr.bf16.mxu0 0
        %2792 = vmatmul.mubr.bf16.gmra.mrb[0].mxu0 %v1489
        %v2793 = vpop.f32.mrb[0].mxu0
        %v2794 = vadd.f32 0.0, %v2793
        %v2795 = vpop.f32.mrb[0].mxu0
        %v2796 = vpop.f32.mrb[0].mxu0
        %v2797 = vadd.f32 0.0, %v2796
        %v2798 = vpop.f32.mrb[0].mxu0
        %2799 = vmatprep.mubr.bf16.mxu0 0
        %2800 = vmatmul.mubr.bf16.gmra.mrb[0].mxu0 %v1492
        %v2801 = vpop.f32.mrb[0].mxu0
        %v2802 = vadd.f32 0.0, %v2801
        %v2803 = vpop.f32.mrb[0].mxu0
        %v2804 = vpop.f32.mrb[0].mxu0
        %v2805 = vadd.f32 0.0, %v2804
        %v2806 = vpop.f32.mrb[0].mxu0
        %2807 = vmatprep.mubr.bf16.mxu0 0
        %2808 = vmatmul.mubr.bf16.gmra.mrb[0].mxu0 %v1495
        %v2809 = vpop.f32.mrb[0].mxu0
        %v2810 = vadd.f32 0.0, %v2809
        %v2811 = vpop.f32.mrb[0].mxu0
        %v2812 = vpop.f32.mrb[0].mxu0
        %v2813 = vadd.f32 0.0, %v2812
        %v2814 = vpop.f32.mrb[0].mxu0
        %2815 = vmatprep.mubr.bf16.mxu0 0
        %2816 = vmatmul.mubr.bf16.gmra.mrb[0].mxu0 %v1498
        %v2817 = vpop.f32.mrb[0].mxu0
        %v2818 = vadd.f32 0.0, %v2817
        %v2819 = vpop.f32.mrb[0].mxu0
        %v2820 = vpop.f32.mrb[0].mxu0
        %v2821 = vadd.f32 0.0, %v2820
        %v2822 = vpop.f32.mrb[0].mxu0
        %2823 = vmatprep.mubr.bf16.mxu0 0
        %2824 = vmatmul.mubr.bf16.gmra.mrb[0].mxu0 %v1501
        %v2825 = vpop.f32.mrb[0].mxu0
        %v2826 = vadd.f32 0.0, %v2825
        %v2827 = vpop.f32.mrb[0].mxu0
        %v2828 = vpop.f32.mrb[0].mxu0
        %v2829 = vadd.f32 0.0, %v2828
        %v2830 = vpop.f32.mrb[0].mxu0
        %2831 = vmatprep.mubr.bf16.mxu0 0
        %2832 = vmatmul.mubr.bf16.gmra.mrb[0].mxu0 %v1504
        %v2833 = vpop.f32.mrb[0].mxu0
        %v2834 = vadd.f32 0.0, %v2833
        %v2835 = vpop.f32.mrb[0].mxu0
        %v2836 = vpop.f32.mrb[0].mxu0
        %v2837 = vadd.f32 0.0, %v2836
        %v2838 = vpop.f32.mrb[0].mxu0
        %2839 = vmatprep.mubr.bf16.mxu0 0
        %2840 = vmatmul.mubr.bf16.gmra.mrb[0].mxu0 %v1507
        %v2841 = vpop.f32.mrb[0].mxu0
        %v2842 = vadd.f32 0.0, %v2841
        %v2843 = vpop.f32.mrb[0].mxu0
        %v2844 = vpop.f32.mrb[0].mxu0
        %v2845 = vadd.f32 0.0, %v2844
        %v2846 = vpop.f32.mrb[0].mxu0
        %2847 = vmatprep.mubr.bf16.mxu0 0
        %2848 = vmatmul.mubr.bf16.gmra.mrb[0].mxu0 %v1510
        %v2849 = vpop.f32.mrb[0].mxu0
        %v2850 = vadd.f32 0.0, %v2849
        %v2851 = vpop.f32.mrb[0].mxu0
        %v2852 = vpop.f32.mrb[0].mxu0
        %v2853 = vadd.f32 0.0, %v2852
        %v2854 = vpop.f32.mrb[0].mxu0
        %2855 = vmatprep.mubr.bf16.mxu0 0
        %2856 = vmatmul.mubr.bf16.gmra.mrb[0].mxu0 %v1513
        %v2857 = vpop.f32.mrb[0].mxu0
        %v2858 = vadd.f32 0.0, %v2857
        %v2859 = vpop.f32.mrb[0].mxu0
        %v2860 = vpop.f32.mrb[0].mxu0
        %v2861 = vadd.f32 0.0, %v2860
        %v2862 = vpop.f32.mrb[0].mxu0
        %2863 = vmatprep.mubr.bf16.mxu0 0
        %2864 = vmatmul.mubr.bf16.gmra.mrb[0].mxu0 %v1516
        %v2865 = vpop.f32.mrb[0].mxu0
        %v2866 = vadd.f32 0.0, %v2865
        %v2867 = vpop.f32.mrb[0].mxu0
        %v2868 = vpop.f32.mrb[0].mxu0
        %v2869 = vadd.f32 0.0, %v2868
        %v2870 = vpop.f32.mrb[0].mxu0
        %2871 = vmatprep.mubr.bf16.mxu0 0
        %2872 = vmatmul.mubr.bf16.gmra.mrb[0].mxu0 %v1519
        %v2873 = vpop.f32.mrb[0].mxu0
        %v2874 = vadd.f32 0.0, %v2873
        %v2875 = vpop.f32.mrb[0].mxu0
        %v2876 = vpop.f32.mrb[0].mxu0
        %v2877 = vadd.f32 0.0, %v2876
        %v2878 = vpop.f32.mrb[0].mxu0
        %2879 = vmatprep.mubr.bf16.mxu0 0
        %2880 = vmatmul.mubr.bf16.gmra.mrb[0].mxu0 %v1522
        %v2881 = vpop.f32.mrb[0].mxu0
        %v2882 = vadd.f32 0.0, %v2881
        %v2883 = vpop.f32.mrb[0].mxu0
        %v2884 = vpop.f32.mrb[0].mxu0
        %v2885 = vadd.f32 0.0, %v2884
        %v2886 = vpop.f32.mrb[0].mxu0
        %2887 = vmatprep.mubr.bf16.mxu0 0
        %2888 = vmatmul.mubr.bf16.gmra.mrb[0].mxu0 %v1525
        %v2889 = vpop.f32.mrb[0].mxu0
        %v2890 = vadd.f32 0.0, %v2889
        %v2891 = vpop.f32.mrb[0].mxu0
        %v2892 = vpop.f32.mrb[0].mxu0
        %v2893 = vadd.f32 0.0, %v2892
        %v2894 = vpop.f32.mrb[0].mxu0
        %2895 = vmatprep.mubr.bf16.mxu0 0
        %2896 = vmatmul.mubr.bf16.gmra.mrb[0].mxu0 %v1528
        %v2897 = vpop.f32.mrb[0].mxu0
        %v2898 = vadd.f32 0.0, %v2897
        %v2899 = vpop.f32.mrb[0].mxu0
        %v2900 = vpop.f32.mrb[0].mxu0
        %v2901 = vadd.f32 0.0, %v2900
        %v2902 = vpop.f32.mrb[0].mxu0
        %2903 = vmatprep.mubr.bf16.mxu0 0
        %2904 = vmatmul.mubr.bf16.gmra.mrb[0].mxu0 %v2141
        %v2905 = vpop.f32.mrb[0].mxu0
        %v2906 = vadd.f32 0.0, %v2905
        %v2907 = vpop.f32.mrb[0].mxu0
        %v2908 = vpop.f32.mrb[0].mxu0
        %v2909 = vadd.f32 0.0, %v2908
        %v2910 = vpop.f32.mrb[0].mxu0
        %2911 = vmatprep.mubr.bf16.mxu0 0
        %2912 = vmatmul.mubr.bf16.gmra.mrb[0].mxu0 %v2754
        %v2913 = vpop.f32.mrb[0].mxu0
        %v2914 = vadd.f32 0.0, %v2913
        %v2915 = vpop.f32.mrb[0].mxu0
        %v2916 = vpop.f32.mrb[0].mxu0
        %v2917 = vadd.f32 0.0, %v2916
        %v2918 = vpop.f32.mrb[0].mxu0
        %2919 = vdwg.mxu0
        %v2920 = vadd.f32 %v2716, %v2794
        %v2921 = vadd.f32 %v2717, %v2797
        %v2922 = vadd.f32 %v2718, %v2802
        %v2923 = vadd.f32 %v2719, %v2805
        %v2924 = vadd.f32 %v2720, %v2810
        %v2925 = vadd.f32 %v2721, %v2813
        %v2926 = vadd.f32 %v2722, %v2818
        %v2927 = vadd.f32 %v2723, %v2821
        %v2928 = vadd.f32 %v2724, %v2826
        %v2929 = vadd.f32 %v2725, %v2829
        %v2930 = vadd.f32 %v2726, %v2834
        %v2931 = vadd.f32 %v2727, %v2837
        %v2932 = vadd.f32 %v2728, %v2842
        %v2933 = vadd.f32 %v2729, %v2845
        %v2934 = vadd.f32 %v2730, %v2850
        %v2935 = vadd.f32 %v2731, %v2853
        %v2936 = vadd.f32 %v2732, %v2858
        %v2937 = vadd.f32 %v2733, %v2861
        %v2938 = vadd.f32 %v2734, %v2866
        %v2939 = vadd.f32 %v2735, %v2869
        %v2940 = vadd.f32 %v2736, %v2874
        %v2941 = vadd.f32 %v2737, %v2877
        %v2942 = vadd.f32 %v2738, %v2882
        %v2943 = vadd.f32 %v2739, %v2885
        %v2944 = vadd.f32 %v2740, %v2890
        %v2945 = vadd.f32 %v2741, %v2893
        %v2946 = vadd.f32 %v2742, %v2898
        %v2947 = vadd.f32 %v2743, %v2901
        %v2948 = vadd.f32 %v2744, %v2906
        %v2949 = vadd.f32 %v2745, %v2909
        %v2950 = vadd.f32 %v2746, %v2914
        %v2951 = vadd.f32 %v2747, %v2917
        %v2952 = vadd.f32 %v2920, %v2921
        %v2953 = vadd.f32 %v2952, %v2922
        %v2954 = vadd.f32 %v2953, %v2923
        %v2955 = vadd.f32 %v2954, %v2924
        %v2956 = vadd.f32 %v2955, %v2925
        %v2957 = vadd.f32 %v2956, %v2926
        %v2958 = vadd.f32 %v2957, %v2927
        %v2959 = vadd.f32 %v2958, %v2928
        %v2960 = vadd.f32 %v2959, %v2929
        %v2961 = vadd.f32 %v2960, %v2930
        %v2962 = vadd.f32 %v2961, %v2931
        %v2963 = vadd.f32 %v2962, %v2932
        %v2964 = vadd.f32 %v2963, %v2933
        %v2965 = vadd.f32 %v2964, %v2934
        %v2966 = vadd.f32 %v2965, %v2935
        %v2967 = vadd.f32 %v2966, %v2936
        %v2968 = vadd.f32 %v2967, %v2937
        %v2969 = vadd.f32 %v2968, %v2938
        %v2970 = vadd.f32 %v2969, %v2939
        %v2971 = vadd.f32 %v2970, %v2940
        %v2972 = vadd.f32 %v2971, %v2941
        %v2973 = vadd.f32 %v2972, %v2942
        %v2974 = vadd.f32 %v2973, %v2943
        %v2975 = vadd.f32 %v2974, %v2944
        %v2976 = vadd.f32 %v2975, %v2945
        %v2977 = vadd.f32 %v2976, %v2946
        %v2978 = vadd.f32 %v2977, %v2947
        %v2979 = vadd.f32 %v2978, %v2948
        %v2980 = vadd.f32 %v2979, %v2949
        %v2981 = vadd.f32 %v2980, %v2950
        %v2982 = vadd.f32 %v2981, %v2951
        %2983 = vst [vmem:[%s183] sm:$0xff] %v2982
        %v2984 = vmul.f32 %v2920, %v2920
        %v2985 = vmul.f32 %v2921, %v2921
        %v2986 = vmul.f32 %v2922, %v2922
        %v2987 = vmul.f32 %v2923, %v2923
        %v2988 = vmul.f32 %v2924, %v2924
        %v2989 = vmul.f32 %v2925, %v2925
        %v2990 = vmul.f32 %v2926, %v2926
        %v2991 = vmul.f32 %v2927, %v2927
        %v2992 = vmul.f32 %v2928, %v2928
        %v2993 = vmul.f32 %v2929, %v2929
        %v2994 = vmul.f32 %v2930, %v2930
        %v2995 = vmul.f32 %v2931, %v2931
        %v2996 = vmul.f32 %v2932, %v2932
        %v2997 = vmul.f32 %v2933, %v2933
        %v2998 = vmul.f32 %v2934, %v2934
        %v2999 = vmul.f32 %v2935, %v2935
        %v3000 = vmul.f32 %v2936, %v2936
        %v3001 = vmul.f32 %v2937, %v2937
        %v3002 = vmul.f32 %v2938, %v2938
        %v3003 = vmul.f32 %v2939, %v2939
        %v3004 = vmul.f32 %v2940, %v2940
        %v3005 = vmul.f32 %v2941, %v2941
        %v3006 = vmul.f32 %v2942, %v2942
        %v3007 = vmul.f32 %v2943, %v2943
        %v3008 = vmul.f32 %v2944, %v2944
        %v3009 = vmul.f32 %v2945, %v2945
        %v3010 = vmul.f32 %v2946, %v2946
        %v3011 = vmul.f32 %v2947, %v2947
        %v3012 = vmul.f32 %v2948, %v2948
        %v3013 = vmul.f32 %v2949, %v2949
        %v3014 = vmul.f32 %v2950, %v2950
        %v3015 = vmul.f32 %v2951, %v2951
        %v3016 = vadd.f32 %v2984, %v2985
        %v3017 = vadd.f32 %v3016, %v2986
        %v3018 = vadd.f32 %v3017, %v2987
        %v3019 = vadd.f32 %v3018, %v2988
        %v3020 = vadd.f32 %v3019, %v2989
        %v3021 = vadd.f32 %v3020, %v2990
        %v3022 = vadd.f32 %v3021, %v2991
        %v3023 = vadd.f32 %v3022, %v2992
        %v3024 = vadd.f32 %v3023, %v2993
        %v3025 = vadd.f32 %v3024, %v2994
        %v3026 = vadd.f32 %v3025, %v2995
        %v3027 = vadd.f32 %v3026, %v2996
        %v3028 = vadd.f32 %v3027, %v2997
        %v3029 = vadd.f32 %v3028, %v2998
        %v3030 = vadd.f32 %v3029, %v2999
        %v3031 = vadd.f32 %v3030, %v3000
        %v3032 = vadd.f32 %v3031, %v3001
        %v3033 = vadd.f32 %v3032, %v3002
        %v3034 = vadd.f32 %v3033, %v3003
        %v3035 = vadd.f32 %v3034, %v3004
        %v3036 = vadd.f32 %v3035, %v3005
        %v3037 = vadd.f32 %v3036, %v3006
        %v3038 = vadd.f32 %v3037, %v3007
        %v3039 = vadd.f32 %v3038, %v3008
        %v3040 = vadd.f32 %v3039, %v3009
        %v3041 = vadd.f32 %v3040, %v3010
        %v3042 = vadd.f32 %v3041, %v3011
        %v3043 = vadd.f32 %v3042, %v3012
        %v3044 = vadd.f32 %v3043, %v3013
        %v3045 = vadd.f32 %v3044, %v3014
        %v3046 = vadd.f32 %v3045, %v3015
        %3047 = vst [vmem:[%s190] sm:$0xff] %v3046
        %s3048 = sand.u32 %s90, 1
        %s3049 = scalar_lea.sflag [#allocation3], %s3048
        %s3050 = sand.u32 %s90, 1
        %s3051 = smul.addr %s3050, 8
        %s3052 = scalar_lea.vmem [#allocation2], %s3051
        %s3053 = sand.u32 %s118, 1
        %s3054 = scalar_lea.sflag [#allocation5], %s3053
        %s3055 = sand.u32 %s118, 1
        %s3056 = smul.addr %s3055, 8
        %s3057 = scalar_lea.vmem [#allocation4], %s3056
        // Predicated region
        $region29: #{tpu_custom_call.1} parent=27 // pred_check
          %p3058 = pneg %p100
        $region30: #{tpu_custom_call.1} parent=27 // pred_check_branch
          %3060 = sbr.rel (%p3058) target = $region32
        $region31: #{tpu_custom_call.1} parent=27 // pred_region
          %s3062 = ssub.s32 128, 128
          %3063 = vsyncadd %s3049, %s3062
          %s3064 = sadd.s32 %s26, %s25
          %s3065 = smul.addr %s3064, 128
          %s3066 = scalar_lea.hbm %s2, %s3065
          %s3068 = sshll.u32 %s3052, 4
          %s3069 = int_to_ptr.vmem [resolvable:$true] %s3068
          %3071 = dma.vmem_to_hbm [thread:$0]  %s3069, 128, %s3066, %s3049
        $region32: #{tpu_custom_call.1} parent=27 // pred_fallthru
          _
        // Predicated region
        $region33: #{tpu_custom_call.1} parent=27 // pred_check
          %p3072 = pneg %p128
        $region34: #{tpu_custom_call.1} parent=27 // pred_check_branch
          %3074 = sbr.rel (%p3072) target = $region36
        $region35: #{tpu_custom_call.1} parent=27 // pred_region
          %s3076 = ssub.s32 128, 128
          %3077 = vsyncadd %s3054, %s3076
          %s3078 = sadd.s32 %s26, %s25
          %s3079 = smul.addr %s3078, 128
          %s3080 = scalar_lea.hbm %s3, %s3079
          %s3082 = sshll.u32 %s3057, 4
          %s3083 = int_to_ptr.vmem [resolvable:$true] %s3082
          %3085 = dma.vmem_to_hbm [thread:$0]  %s3083, 128, %s3080, %s3054
        $region36: #{tpu_custom_call.1} parent=27 // pred_fallthru
          _
      $region28: #{tpu_custom_call.1} parent=5 // pred_fallthru
        _
      %p3086 = scmp.le.s32.totalorder 2, %s16
      // Predicated region
      $region37: #{tpu_custom_call.1} parent=5 // pred_check
        %p3087 = pneg %p3086
      $region38: #{tpu_custom_call.1} parent=5 // pred_check_branch
        %3089 = sbr.rel (%p3087) target = $region40
      $region39: #{tpu_custom_call.1} parent=5 // pred_region
        %s3090 = ssub.s32 %s16, 2
        // Predicated region
        $region41: #{tpu_custom_call.1} parent=39 // pred_check
          %p3091 = pneg %p106
        $region42: #{tpu_custom_call.1} parent=39 // pred_check_branch
          %3093 = sbr.rel (%p3091) target = $region44
        $region43: #{tpu_custom_call.1} parent=39 // pred_region
          %s3094 = sand.u32 %s91, 1
          %s3095 = scalar_lea.sflag [#allocation3], %s3094
          %s3096 = sand.u32 %s91, 1
          %s3097 = smul.addr %s3096, 8
          %s3098 = scalar_lea.vmem [#allocation2], %s3097
          %3099 = dma.done %s3095, 128
        $region44: #{tpu_custom_call.1} parent=39 // pred_fallthru
          _
        // Predicated region
        $region45: #{tpu_custom_call.1} parent=39 // pred_check
          %p3100 = pneg %p134
        $region46: #{tpu_custom_call.1} parent=39 // pred_check_branch
          %3102 = sbr.rel (%p3100) target = $region48
        $region47: #{tpu_custom_call.1} parent=39 // pred_region
          %s3103 = sand.u32 %s119, 1
          %s3104 = scalar_lea.sflag [#allocation5], %s3103
          %s3105 = sand.u32 %s119, 1
          %s3106 = smul.addr %s3105, 8
          %s3107 = scalar_lea.vmem [#allocation4], %s3106
          %3108 = dma.done %s3104, 128
        $region48: #{tpu_custom_call.1} parent=39 // pred_fallthru
          _
      $region40: #{tpu_custom_call.1} parent=5 // pred_fallthru
        _
    $region6: #{tpu_custom_call.1} parent=1 // loop_footer
      %s20 = sadd.s32 1, %s16
    $region7: #{tpu_custom_call.1} parent=1 // loop_footer_branch
      %15 = sbr.rel target = $region3
    $region8: #{tpu_custom_call.1} parent=1 // loop_exit
      _
    %3109 = vsyncpa [#allocation3], 1
    %s3110 = scalar_lea.sflag [#allocation3], 1
    %3111 = vsyncpa %s3110, 1
    %3112 = vsyncpa [#allocation5], 1
    %s3113 = scalar_lea.sflag [#allocation5], 1
    %3114 = vsyncpa %s3113, 1

</llo_original>
